<compile_context>
chip_gen: v6e
topology: v6e:2x2x1
jax: 0.10.0
libtpu: 0.0.40
codegen_flags: <defaults>
</compile_context>

<pallas_src>
import collections
import functools

import jax
import jax.numpy as jnp
from jax.experimental import pallas as pl
from jax.experimental.pallas import tpu as pltpu


def _tinynerf_kernel(x_ref,
                     w13_ref, b1_ref,
                     w2_ref, b2_ref,
                     w3a_ref, b3_ref,
                     w4_ref, b4_ref,
                     o_ref):
    cdt = w2_ref.dtype                     # compute dtype (bf16 fast path or f32)
    H = w2_ref.shape[0]

    # In-kernel cast: x lives in HBM as f32; the cast is a few VPU ops that hide under the MXU.
    x = x_ref[...].astype(cdt)

    # Fused x-side matmul: x @ [w1 | w3b] -> [rows, 2H]  (f32 accumulation).
    xw = jnp.dot(x, w13_ref[...], preferred_element_type=jnp.float32)

    h1 = jnp.maximum(xw[:, :H] + b1_ref[...], 0.0).astype(cdt)
    skip = xw[:, H:]                       # x @ w3[H:], the layer-3 skip term (f32)

    h2 = jnp.maximum(
        jnp.dot(h1, w2_ref[...], preferred_element_type=jnp.float32) + b2_ref[...],
        0.0).astype(cdt)

    # layer3(cat([h2, x])) == h2 @ w3[:H] + x @ w3[H:] + b3
    h3 = jnp.maximum(
        jnp.dot(h2, w3a_ref[...], preferred_element_type=jnp.float32) + skip + b3_ref[...],
        0.0).astype(cdt)

    # Natural-orientation final layer: [rows, H] @ [H, 4] -> [rows, 4]; w4 is the stationary
    # MXU operand and is loaded once per tile, no transposes of h3 anywhere.
    out = jnp.dot(h3, w4_ref[...], preferred_element_type=jnp.float32) + b4_ref[...]
    o_ref[...] = out.astype(o_ref.dtype)


_Caps = collections.namedtuple(
    "_Caps", ["vmem_limit_bytes", "rt_cap_f32", "rt_cap_bf16", "two_cores"])


@functools.lru_cache(maxsize=1)
def _tpu_caps():
    """Generation-aware VMEM limit / row-tile caps (v7x has half the VMEM and 2 TensorCores)."""
    vmem_bytes = None
    try:
        vmem_bytes = getattr(pltpu.get_tpu_info(), "vmem_capacity_bytes", None)
    except Exception:
        vmem_bytes = None
    kind = ""
    try:
        kind = jax.devices()[0].device_kind.lower()
    except Exception:
        pass
    is_v7 = ("v7" in kind) or (vmem_bytes is not None and vmem_bytes <= 80 * (1 << 20))
    if is_v7:
        # 64 MiB physical VMEM. Row cap kept at 4096 (below the suggested 8192 for bf16)
        # because the narrow 39-/4-wide blocks get lane-padded to 128 in VMEM, inflating the
        # resident set; 4096 keeps comfortable margin under the 56 MiB scoped limit.
        return _Caps(vmem_limit_bytes=56 << 20, rt_cap_f32=4096, rt_cap_bf16=4096,
                     two_cores=True)
    # v5e / v6e: 128 MiB physical VMEM, single TensorCore per chip.
    return _Caps(vmem_limit_bytes=96 << 20, rt_cap_f32=4096, rt_cap_bf16=8192,
                 two_cores=False)


def _pick_row_tile(n_rows, cap, two_cores):
    """Row tile is the sublane dim of the x / out blocks: multiple of 8 (or == n_rows if tiny)."""
    if n_rows <= 8:
        return n_rows
    cap = max(8, (cap // 8) * 8)
    steps = pl.cdiv(n_rows, cap)
    if two_cores:
        # The "parallel" grid axis is split across v7x's two TensorCores: keep an even,
        # balanced step count so neither core idles on a lone or tiny trailing block.
        if steps == 1 and n_rows >= 2048:
            steps = 2
        elif steps > 1 and steps % 2 == 1:
            steps += 1
    rt = ((pl.cdiv(n_rows, steps) + 7) // 8) * 8   # balanced tile, rounded up to sublane mult.
    return min(rt, cap)


def prepare_tinynerf_params(params, *, use_bf16=True):
    """One-time weight prep (hoisted out of the forward path). Biases stay f32."""
    H = params["w1"].shape[1]
    w3 = params["w3"]                      # [H + in_dim, H]
    w3a = w3[:H]                           # [H, H]        acts on h2
    w3b = w3[H:]                           # [in_dim, H]   acts on x (skip)
    w13 = jnp.concatenate([params["w1"], w3b], axis=1)     # [in_dim, 2H] fused x-path weight
    cdt = jnp.bfloat16 if use_bf16 else jnp.float32
    return dict(
        w13=w13.astype(cdt),
        b1=params["b1"].reshape(1, H).astype(jnp.float32),
        w2=params["w2"].astype(cdt),
        b2=params["b2"].reshape(1, H).astype(jnp.float32),
        w3a=w3a.astype(cdt),
        b3=params["b3"].reshape(1, H).astype(jnp.float32),
        w4=params["w4"].astype(cdt),                        # [H, 4]
        b4=params["b4"].reshape(1, -1).astype(jnp.float32), # [1, 4]
    )


def tinynerf_forward(x, prepped, *, row_tile=None):
    """x: [N, in_dim] float32. prepped: output of prepare_tinynerf_params. Returns [N, 4] f32.

    row_tile (optional) caps the auto-selected row tile (useful for tests / tiny batches).
    """
    N, in_dim = x.shape
    H = prepped["w2"].shape[0]
    out_dim = prepped["w4"].shape[1]
    use_bf16 = prepped["w2"].dtype == jnp.bfloat16

    caps = _tpu_caps()
    cap = caps.rt_cap_bf16 if use_bf16 else caps.rt_cap_f32
    if row_tile is not None:
        cap = min(cap, row_tile)
    rt = _pick_row_tile(N, cap, caps.two_cores)
    grid = pl.cdiv(N, rt)

    # Constant index_map -> block never changes -> Pallas fetches these only once.
    full = lambda shape: pl.BlockSpec(shape, lambda i: (0,) * len(shape))

    out = pl.pallas_call(
        _tinynerf_kernel,
        out_shape=jax.ShapeDtypeStruct((N, out_dim), jnp.float32),
        grid_spec=pltpu.PrefetchScalarGridSpec(
            num_scalar_prefetch=0,
            grid=(grid,),
            in_specs=[
                pl.BlockSpec((rt, in_dim), lambda i: (i, 0)),   # x (f32; edge block padded)
                full(prepped["w13"].shape),   # w13 = [w1 | w3b]
                full(prepped["b1"].shape),    # b1
                full(prepped["w2"].shape),    # w2
                full(prepped["b2"].shape),    # b2
                full(prepped["w3a"].shape),   # w3a
                full(prepped["b3"].shape),    # b3
                full(prepped["w4"].shape),    # w4
                full(prepped["b4"].shape),    # b4
            ],
            # Direct [rt, 4] output blocks: HBM writeback is contiguous full rows, the few
            # masked 4-lane vreg stores per tile hide in the otherwise-slack store slot, and
            # no transpose is needed anywhere (kernel or wrapper).
            out_specs=pl.BlockSpec((rt, out_dim), lambda i: (i, 0)),
        ),
        compiler_params=pltpu.CompilerParams(
            dimension_semantics=("parallel",),
            vmem_limit_bytes=caps.vmem_limit_bytes,
        ),
    )(x, prepped["w13"], prepped["b1"], prepped["w2"], prepped["b2"],
      prepped["w3a"], prepped["b3"], prepped["w4"], prepped["b4"])

    return out                              # [N, 4]


def init_tinynerf_params(key, hidden_dim=128, L_embed=6):
    """Deterministic init mimicking torch.nn.Linear (uniform +-1/sqrt(fan_in))."""
    in_dim = 3 + 3 * 2 * L_embed  # 39

    def linear(key, fan_in, fan_out):
        kw, kb = jax.random.split(key)
        bound = 1.0 / jnp.sqrt(fan_in)
        w = jax.random.uniform(kw, (fan_in, fan_out), jnp.float32, -bound, bound)
        b = jax.random.uniform(kb, (1, fan_out), jnp.float32, -bound, bound)
        return w, b

    k1, k2, k3, k4 = jax.random.split(key, 4)
    w1, b1 = linear(k1, in_dim, hidden_dim)
    w2, b2 = linear(k2, hidden_dim, hidden_dim)
    w3, b3 = linear(k3, hidden_dim + in_dim, hidden_dim)
    w4, b4 = linear(k4, hidden_dim, 4)
    return dict(w1=w1, b1=b1, w2=w2, b2=b2, w3=w3, b3=b3, w4=w4, b4=b4), in_dim


def tinynerf_reference(x, params):
    h1 = jax.nn.relu(x @ params["w1"] + params["b1"])
    h2 = jax.nn.relu(h1 @ params["w2"] + params["b2"])
    h3 = jax.nn.relu(jnp.concatenate([h2, x], axis=-1) @ params["w3"] + params["b3"])
    return h3 @ params["w4"] + params["b4"]


if __name__ == "__main__":
    key = jax.random.PRNGKey(0)
    kparams, kx = jax.random.split(key)

    hidden_dim, L_embed = 128, 6          # module defaults: in_dim = 39
    params, in_dim = init_tinynerf_params(kparams, hidden_dim, L_embed)

    # Small flattened (rays * samples) batch; not a multiple of the tile so the
    # padded-read / masked-write edge-block path is exercised.
    N = 1032
    x = jax.random.normal(kx, (N, in_dim), jnp.float32)

    ref = tinynerf_reference(x, params)

    # f32 path, small forced row tile -> multi-step grid + partial edge block.
    prep_f32 = prepare_tinynerf_params(params, use_bf16=False)
    out_f32 = jax.block_until_ready(tinynerf_forward(x, prep_f32, row_tile=512))
    assert out_f32.shape == (N, 4)
    assert jnp.allclose(out_f32, ref, atol=1e-4, rtol=1e-4)

    # Default bf16 operand fast path (f32 accumulation), auto tile -- looser tolerance.
    prep_bf16 = prepare_tinynerf_params(params)          # use_bf16=True is the default
    out_bf16 = jax.block_until_ready(tinynerf_forward(x, prep_bf16))
    rel_err = jnp.max(jnp.abs(out_bf16 - ref)) / (jnp.max(jnp.abs(ref)) + 1e-6)
    assert out_bf16.shape == (N, 4)
    assert rel_err < 5e-2

    print("KERNEL_OK")
</pallas_src>

<mosaic_0001>
module attributes {stable_mosaic.version = 11 : i64} {
  func.func @_tinynerf_kernel(%arg0: i32, %arg1: memref<344x39xf32, #tpu.memory_space<vmem>>, %arg2: memref<39x256xf32, #tpu.memory_space<vmem>>, %arg3: memref<1x128xf32, #tpu.memory_space<vmem>>, %arg4: memref<128x128xf32, #tpu.memory_space<vmem>>, %arg5: memref<1x128xf32, #tpu.memory_space<vmem>>, %arg6: memref<128x128xf32, #tpu.memory_space<vmem>>, %arg7: memref<1x128xf32, #tpu.memory_space<vmem>>, %arg8: memref<128x4xf32, #tpu.memory_space<vmem>>, %arg9: memref<1x4xf32, #tpu.memory_space<vmem>>, %arg10: memref<344x4xf32, #tpu.memory_space<vmem>>) attributes {dimension_semantics = [#tpu.dimension_semantics<parallel>], iteration_bounds = array<i64: 3>, scalar_prefetch = 0 : i64, scratch_operands = 0 : i64, tpu.core_type = #tpu.core_type<tc>, window_params = [{transform_indices = @transform_0, window_bounds = array<i64: 344, 39>}, {pipeline_mode = #tpu.pipeline_mode<synchronous>, transform_indices = @transform_1, window_bounds = array<i64: 39, 256>}, {pipeline_mode = #tpu.pipeline_mode<synchronous>, transform_indices = @transform_2, window_bounds = array<i64: 1, 128>}, {pipeline_mode = #tpu.pipeline_mode<synchronous>, transform_indices = @transform_3, window_bounds = array<i64: 128, 128>}, {pipeline_mode = #tpu.pipeline_mode<synchronous>, transform_indices = @transform_4, window_bounds = array<i64: 1, 128>}, {pipeline_mode = #tpu.pipeline_mode<synchronous>, transform_indices = @transform_5, window_bounds = array<i64: 128, 128>}, {pipeline_mode = #tpu.pipeline_mode<synchronous>, transform_indices = @transform_6, window_bounds = array<i64: 1, 128>}, {pipeline_mode = #tpu.pipeline_mode<synchronous>, transform_indices = @transform_7, window_bounds = array<i64: 128, 4>}, {pipeline_mode = #tpu.pipeline_mode<synchronous>, transform_indices = @transform_8, window_bounds = array<i64: 1, 4>}, {transform_indices = @transform_9, window_bounds = array<i64: 344, 4>}]} {
    %c0 = arith.constant 0 : index
    %c0_0 = arith.constant 0 : index
    %0 = vector.load %arg1[%c0, %c0_0] : memref<344x39xf32, #tpu.memory_space<vmem>>, vector<344x39xf32>
    %c0_1 = arith.constant 0 : index
    %c0_2 = arith.constant 0 : index
    %1 = vector.load %arg2[%c0_1, %c0_2] : memref<39x256xf32, #tpu.memory_space<vmem>>, vector<39x256xf32>
    %cst = arith.constant dense<0.000000e+00> : vector<344x256xf32>
    %2 = tpu.matmul %0, %1, %cst {dimension_numbers = #tpu.dot_dimension_numbers<[1], [0], [0], [1], [0, 0, 1, 1], [], []>} : vector<344x39xf32>, vector<39x256xf32>, vector<344x256xf32> -> vector<344x256xf32>
    %3 = vector.extract_strided_slice %2 {offsets = [0, 0], sizes = [344, 128], strides = [1, 1]} : vector<344x256xf32> to vector<344x128xf32>
    %c0_3 = arith.constant 0 : index
    %c0_4 = arith.constant 0 : index
    %4 = vector.load %arg3[%c0_3, %c0_4] : memref<1x128xf32, #tpu.memory_space<vmem>>, vector<1x128xf32>
    %5 = vector.broadcast %4 : vector<1x128xf32> to vector<344x128xf32>
    %6 = arith.addf %3, %5 : vector<344x128xf32>
    %cst_5 = arith.constant 0.000000e+00 : f32
    %7 = vector.broadcast %cst_5 : f32 to vector<344x128xf32>
    %8 = arith.maximumf %6, %7 : vector<344x128xf32>
    %9 = vector.extract_strided_slice %2 {offsets = [0, 128], sizes = [344, 128], strides = [1, 1]} : vector<344x256xf32> to vector<344x128xf32>
    %c0_6 = arith.constant 0 : index
    %c0_7 = arith.constant 0 : index
    %10 = vector.load %arg4[%c0_6, %c0_7] : memref<128x128xf32, #tpu.memory_space<vmem>>, vector<128x128xf32>
    %cst_8 = arith.constant dense<0.000000e+00> : vector<344x128xf32>
    %11 = tpu.matmul %8, %10, %cst_8 {dimension_numbers = #tpu.dot_dimension_numbers<[1], [0], [0], [1], [0, 0, 1, 1], [], []>} : vector<344x128xf32>, vector<128x128xf32>, vector<344x128xf32> -> vector<344x128xf32>
    %c0_9 = arith.constant 0 : index
    %c0_10 = arith.constant 0 : index
    %12 = vector.load %arg5[%c0_9, %c0_10] : memref<1x128xf32, #tpu.memory_space<vmem>>, vector<1x128xf32>
    %13 = vector.broadcast %12 : vector<1x128xf32> to vector<344x128xf32>
    %14 = arith.addf %11, %13 : vector<344x128xf32>
    %cst_11 = arith.constant 0.000000e+00 : f32
    %15 = vector.broadcast %cst_11 : f32 to vector<344x128xf32>
    %16 = arith.maximumf %14, %15 : vector<344x128xf32>
    %c0_12 = arith.constant 0 : index
    %c0_13 = arith.constant 0 : index
    %17 = vector.load %arg6[%c0_12, %c0_13] : memref<128x128xf32, #tpu.memory_space<vmem>>, vector<128x128xf32>
    %cst_14 = arith.constant dense<0.000000e+00> : vector<344x128xf32>
    %18 = tpu.matmul %16, %17, %cst_14 {dimension_numbers = #tpu.dot_dimension_numbers<[1], [0], [0], [1], [0, 0, 1, 1], [], []>} : vector<344x128xf32>, vector<128x128xf32>, vector<344x128xf32> -> vector<344x128xf32>
    %19 = arith.addf %18, %9 : vector<344x128xf32>
    %c0_15 = arith.constant 0 : index
    %c0_16 = arith.constant 0 : index
    %20 = vector.load %arg7[%c0_15, %c0_16] : memref<1x128xf32, #tpu.memory_space<vmem>>, vector<1x128xf32>
    %21 = vector.broadcast %20 : vector<1x128xf32> to vector<344x128xf32>
    %22 = arith.addf %19, %21 : vector<344x128xf32>
    %cst_17 = arith.constant 0.000000e+00 : f32
    %23 = vector.broadcast %cst_17 : f32 to vector<344x128xf32>
    %24 = arith.maximumf %22, %23 : vector<344x128xf32>
    %c0_18 = arith.constant 0 : index
    %c0_19 = arith.constant 0 : index
    %25 = vector.load %arg8[%c0_18, %c0_19] : memref<128x4xf32, #tpu.memory_space<vmem>>, vector<128x4xf32>
    %cst_20 = arith.constant dense<0.000000e+00> : vector<344x4xf32>
    %26 = tpu.matmul %24, %25, %cst_20 {dimension_numbers = #tpu.dot_dimension_numbers<[1], [0], [0], [1], [0, 0, 1, 1], [], []>} : vector<344x128xf32>, vector<128x4xf32>, vector<344x4xf32> -> vector<344x4xf32>
    %c0_21 = arith.constant 0 : index
    %c0_22 = arith.constant 0 : index
    %27 = vector.load %arg9[%c0_21, %c0_22] : memref<1x4xf32, #tpu.memory_space<vmem>>, vector<1x4xf32>
    %28 = vector.broadcast %27 : vector<1x4xf32> to vector<344x4xf32>
    %29 = arith.addf %26, %28 : vector<344x4xf32>
    %c0_23 = arith.constant 0 : index
    %c0_24 = arith.constant 0 : index
    %30 = vector.load %arg10[%c0_23, %c0_24] : memref<344x4xf32, #tpu.memory_space<vmem>>, vector<344x4xf32>
    tpu.vector_store %arg10[%c0_23, %c0_24], %29 {strides = array<i32>} : memref<344x4xf32, #tpu.memory_space<vmem>>, vector<344x4xf32>,
    return
  }
  func.func @transform_0(%arg0: i32) -> (i32, i32) {
    %c0_i32 = arith.constant 0 : i32
    %c0_i32_0 = arith.constant 0 : i32
    return %arg0, %c0_i32 : i32, i32
  }
  func.func @transform_1(%arg0: i32) -> (i32, i32) {
    %c0_i32 = arith.constant 0 : i32
    %c0_i32_0 = arith.constant 0 : i32
    %c0_i32_1 = arith.constant 0 : i32
    return %c0_i32, %c0_i32_0 : i32, i32
  }
  func.func @transform_2(%arg0: i32) -> (i32, i32) {
    %c0_i32 = arith.constant 0 : i32
    %c0_i32_0 = arith.constant 0 : i32
    %c0_i32_1 = arith.constant 0 : i32
    return %c0_i32, %c0_i32_0 : i32, i32
  }
  func.func @transform_3(%arg0: i32) -> (i32, i32) {
    %c0_i32 = arith.constant 0 : i32
    %c0_i32_0 = arith.constant 0 : i32
    %c0_i32_1 = arith.constant 0 : i32
    return %c0_i32, %c0_i32_0 : i32, i32
  }
  func.func @transform_4(%arg0: i32) -> (i32, i32) {
    %c0_i32 = arith.constant 0 : i32
    %c0_i32_0 = arith.constant 0 : i32
    %c0_i32_1 = arith.constant 0 : i32
    return %c0_i32, %c0_i32_0 : i32, i32
  }
  func.func @transform_5(%arg0: i32) -> (i32, i32) {
    %c0_i32 = arith.constant 0 : i32
    %c0_i32_0 = arith.constant 0 : i32
    %c0_i32_1 = arith.constant 0 : i32
    return %c0_i32, %c0_i32_0 : i32, i32
  }
  func.func @transform_6(%arg0: i32) -> (i32, i32) {
    %c0_i32 = arith.constant 0 : i32
    %c0_i32_0 = arith.constant 0 : i32
    %c0_i32_1 = arith.constant 0 : i32
    return %c0_i32, %c0_i32_0 : i32, i32
  }
  func.func @transform_7(%arg0: i32) -> (i32, i32) {
    %c0_i32 = arith.constant 0 : i32
    %c0_i32_0 = arith.constant 0 : i32
    %c0_i32_1 = arith.constant 0 : i32
    return %c0_i32, %c0_i32_0 : i32, i32
  }
  func.func @transform_8(%arg0: i32) -> (i32, i32) {
    %c0_i32 = arith.constant 0 : i32
    %c0_i32_0 = arith.constant 0 : i32
    %c0_i32_1 = arith.constant 0 : i32
    return %c0_i32, %c0_i32_0 : i32, i32
  }
  func.func @transform_9(%arg0: i32) -> (i32, i32) {
    %c0_i32 = arith.constant 0 : i32
    %c0_i32_0 = arith.constant 0 : i32
    return %arg0, %c0_i32 : i32, i32
  }
}

</mosaic_0001>

<llo_original>
// kernel: tpu_custom_call.1
$region0: #{tpu_custom_call.1}
  #allocation0 [shape = 'u32[]', space=smem, size = 0x4, offset = 0x4, fixed_abs, tag = 'smem constant byte address 0x4 - core index']
  #allocation1 [shape = 'u32[144,128]{1,0:T(1,128)}', space=vmem, size = 0x12000, scoped, tag = 'internal scratch']
  %s0 = inlined_call_operand.vmem [shape: f32[1032,39], index: 0, kind: input, shape index: {}]
  %s1 = inlined_call_operand.vmem [shape: f32[39,256], index: 1, kind: input, shape index: {}]
  %s2 = inlined_call_operand.vmem [shape: f32[1,128], index: 2, kind: input, shape index: {}]
  %s3 = inlined_call_operand.vmem [shape: f32[128,128], index: 3, kind: input, shape index: {}]
  %s4 = inlined_call_operand.vmem [shape: f32[1,128], index: 4, kind: input, shape index: {}]
  %s5 = inlined_call_operand.vmem [shape: f32[128,128], index: 5, kind: input, shape index: {}]
  %s6 = inlined_call_operand.vmem [shape: f32[1,128], index: 6, kind: input, shape index: {}]
  %s7 = inlined_call_operand.vmem [shape: f32[128,4], index: 7, kind: input, shape index: {}]
  %s8 = inlined_call_operand.vmem [shape: f32[1,4], index: 8, kind: input, shape index: {}]
  %s9 = inlined_call_operand.vmem [shape: f32[1032,4], index: 9, kind: output, shape index: {}]
  %s10 = sld [smem:[#allocation0]]
  $region69: #{tpu_custom_call.1} parent=0
    _
  %s12 = ssub.s32 1, %s10
  %s13 = scalar_select 0, %s12, %s10
  loop: start=0, step=1, limit=5
  $region2: #{tpu_custom_call.1} parent=0 // loop_pre_header
    _
  $region3: #{tpu_custom_call.1} parent=0 // loop_header
    %s15 = sphi 0, %s19
    %p16 = scmp.ge.s32.totalorder %s15, 5
    %s25 = sphi 0, %s27
    %s28 = sphi 0, %s25
    %s29 = sphi 0, %s28
    %s45 = sphi 0, %s29
    %s49 = sphi 0, %s49
    %s51 = sphi 0, %s49
    %s52 = sphi 0, %s51
    %s66 = sphi 0, %s52
    %s70 = sphi 0, %s70
    %s72 = sphi 0, %s70
    %s73 = sphi 0, %s72
    %s87 = sphi 0, %s73
    %s91 = sphi 0, %s91
    %s93 = sphi 0, %s91
    %s94 = sphi 0, %s93
    %s108 = sphi 0, %s94
    %s112 = sphi 0, %s112
    %s114 = sphi 0, %s112
    %s115 = sphi 0, %s114
    %s129 = sphi 0, %s115
    %s133 = sphi 0, %s133
    %s135 = sphi 0, %s133
    %s136 = sphi 0, %s135
    %s150 = sphi 0, %s136
    %s154 = sphi 0, %s154
    %s156 = sphi 0, %s154
    %s157 = sphi 0, %s156
    %s171 = sphi 0, %s157
    %s175 = sphi 0, %s175
    %s177 = sphi 0, %s175
    %s178 = sphi 0, %s177
    %s192 = sphi 0, %s178
    %s196 = sphi 0, %s196
    %s198 = sphi 0, %s196
    %s199 = sphi 0, %s198
    %s213 = sphi 0, %s199
    %s219 = sphi 0, %s221
    %s222 = sphi 0, %s219
    %s223 = sphi 0, %s222
    %s239 = sphi 0, %s223
  $region4: #{tpu_custom_call.1} parent=0 // loop_header_branch
    %18 = sbr.rel (%p16) target = $region8
  $region5: #{tpu_custom_call.1} parent=0 // loop_body
    %s20 = ssub.s32 %s15, 1
    %s21 = ssub.s32 %s15, 2
    %s22 = sadd.s32 %s15, 1
    %s23 = ssub.s32 %s15, %s22
    %p24 = scmp.eq.s32.totalorder %s23, 0
    %s26 = sadd.s32 %s25, 1
    %s27 = scalar_select %p24, %s25, %s26
    %p30 = pneg %p24
    %p31 = scmp.eq.s32.totalorder %s15, 2
    %p32 = por %p30, %p31
    %p33 = scmp.ne.s32.totalorder %s25, %s28
    %p34 = scmp.eq.s32.totalorder %s15, 0
    %p35 = por %p33, %p34
    %p36 = scmp.ne.s32.totalorder %s25, %s28
    %p37 = scmp.eq.s32.totalorder %s20, 2
    %p38 = por %p36, %p37
    %p39 = scmp.ne.s32.totalorder %s28, %s29
    %p40 = scmp.eq.s32.totalorder %s20, 0
    %p41 = por %p39, %p40
    %p42 = scmp.ne.s32.totalorder %s28, %s29
    %p43 = scmp.eq.s32.totalorder %s21, 2
    %p44 = por %p42, %p43
    %p46 = scmp.ne.s32.totalorder %s29, %s45
    %p47 = scmp.eq.s32.totalorder %s21, 0
    %p48 = por %p46, %p47
    %s50 = sadd.s32 %s49, 1
    %p53 = scmp.eq.s32.totalorder %s15, 2
    %p54 = scmp.ne.s32.totalorder %s49, %s51
    %p55 = scmp.eq.s32.totalorder %s15, 0
    %p56 = por %p54, %p55
    %p57 = scmp.ne.s32.totalorder %s49, %s51
    %p58 = scmp.eq.s32.totalorder %s20, 2
    %p59 = por %p57, %p58
    %p60 = scmp.ne.s32.totalorder %s51, %s52
    %p61 = scmp.eq.s32.totalorder %s20, 0
    %p62 = por %p60, %p61
    %p63 = scmp.ne.s32.totalorder %s51, %s52
    %p64 = scmp.eq.s32.totalorder %s21, 2
    %p65 = por %p63, %p64
    %p67 = scmp.ne.s32.totalorder %s52, %s66
    %p68 = scmp.eq.s32.totalorder %s21, 0
    %p69 = por %p67, %p68
    %s71 = sadd.s32 %s70, 1
    %p74 = scmp.eq.s32.totalorder %s15, 2
    %p75 = scmp.ne.s32.totalorder %s70, %s72
    %p76 = scmp.eq.s32.totalorder %s15, 0
    %p77 = por %p75, %p76
    %p78 = scmp.ne.s32.totalorder %s70, %s72
    %p79 = scmp.eq.s32.totalorder %s20, 2
    %p80 = por %p78, %p79
    %p81 = scmp.ne.s32.totalorder %s72, %s73
    %p82 = scmp.eq.s32.totalorder %s20, 0
    %p83 = por %p81, %p82
    %p84 = scmp.ne.s32.totalorder %s72, %s73
    %p85 = scmp.eq.s32.totalorder %s21, 2
    %p86 = por %p84, %p85
    %p88 = scmp.ne.s32.totalorder %s73, %s87
    %p89 = scmp.eq.s32.totalorder %s21, 0
    %p90 = por %p88, %p89
    %s92 = sadd.s32 %s91, 1
    %p95 = scmp.eq.s32.totalorder %s15, 2
    %p96 = scmp.ne.s32.totalorder %s91, %s93
    %p97 = scmp.eq.s32.totalorder %s15, 0
    %p98 = por %p96, %p97
    %p99 = scmp.ne.s32.totalorder %s91, %s93
    %p100 = scmp.eq.s32.totalorder %s20, 2
    %p101 = por %p99, %p100
    %p102 = scmp.ne.s32.totalorder %s93, %s94
    %p103 = scmp.eq.s32.totalorder %s20, 0
    %p104 = por %p102, %p103
    %p105 = scmp.ne.s32.totalorder %s93, %s94
    %p106 = scmp.eq.s32.totalorder %s21, 2
    %p107 = por %p105, %p106
    %p109 = scmp.ne.s32.totalorder %s94, %s108
    %p110 = scmp.eq.s32.totalorder %s21, 0
    %p111 = por %p109, %p110
    %s113 = sadd.s32 %s112, 1
    %p116 = scmp.eq.s32.totalorder %s15, 2
    %p117 = scmp.ne.s32.totalorder %s112, %s114
    %p118 = scmp.eq.s32.totalorder %s15, 0
    %p119 = por %p117, %p118
    %p120 = scmp.ne.s32.totalorder %s112, %s114
    %p121 = scmp.eq.s32.totalorder %s20, 2
    %p122 = por %p120, %p121
    %p123 = scmp.ne.s32.totalorder %s114, %s115
    %p124 = scmp.eq.s32.totalorder %s20, 0
    %p125 = por %p123, %p124
    %p126 = scmp.ne.s32.totalorder %s114, %s115
    %p127 = scmp.eq.s32.totalorder %s21, 2
    %p128 = por %p126, %p127
    %p130 = scmp.ne.s32.totalorder %s115, %s129
    %p131 = scmp.eq.s32.totalorder %s21, 0
    %p132 = por %p130, %p131
    %s134 = sadd.s32 %s133, 1
    %p137 = scmp.eq.s32.totalorder %s15, 2
    %p138 = scmp.ne.s32.totalorder %s133, %s135
    %p139 = scmp.eq.s32.totalorder %s15, 0
    %p140 = por %p138, %p139
    %p141 = scmp.ne.s32.totalorder %s133, %s135
    %p142 = scmp.eq.s32.totalorder %s20, 2
    %p143 = por %p141, %p142
    %p144 = scmp.ne.s32.totalorder %s135, %s136
    %p145 = scmp.eq.s32.totalorder %s20, 0
    %p146 = por %p144, %p145
    %p147 = scmp.ne.s32.totalorder %s135, %s136
    %p148 = scmp.eq.s32.totalorder %s21, 2
    %p149 = por %p147, %p148
    %p151 = scmp.ne.s32.totalorder %s136, %s150
    %p152 = scmp.eq.s32.totalorder %s21, 0
    %p153 = por %p151, %p152
    %s155 = sadd.s32 %s154, 1
    %p158 = scmp.eq.s32.totalorder %s15, 2
    %p159 = scmp.ne.s32.totalorder %s154, %s156
    %p160 = scmp.eq.s32.totalorder %s15, 0
    %p161 = por %p159, %p160
    %p162 = scmp.ne.s32.totalorder %s154, %s156
    %p163 = scmp.eq.s32.totalorder %s20, 2
    %p164 = por %p162, %p163
    %p165 = scmp.ne.s32.totalorder %s156, %s157
    %p166 = scmp.eq.s32.totalorder %s20, 0
    %p167 = por %p165, %p166
    %p168 = scmp.ne.s32.totalorder %s156, %s157
    %p169 = scmp.eq.s32.totalorder %s21, 2
    %p170 = por %p168, %p169
    %p172 = scmp.ne.s32.totalorder %s157, %s171
    %p173 = scmp.eq.s32.totalorder %s21, 0
    %p174 = por %p172, %p173
    %s176 = sadd.s32 %s175, 1
    %p179 = scmp.eq.s32.totalorder %s15, 2
    %p180 = scmp.ne.s32.totalorder %s175, %s177
    %p181 = scmp.eq.s32.totalorder %s15, 0
    %p182 = por %p180, %p181
    %p183 = scmp.ne.s32.totalorder %s175, %s177
    %p184 = scmp.eq.s32.totalorder %s20, 2
    %p185 = por %p183, %p184
    %p186 = scmp.ne.s32.totalorder %s177, %s178
    %p187 = scmp.eq.s32.totalorder %s20, 0
    %p188 = por %p186, %p187
    %p189 = scmp.ne.s32.totalorder %s177, %s178
    %p190 = scmp.eq.s32.totalorder %s21, 2
    %p191 = por %p189, %p190
    %p193 = scmp.ne.s32.totalorder %s178, %s192
    %p194 = scmp.eq.s32.totalorder %s21, 0
    %p195 = por %p193, %p194
    %s197 = sadd.s32 %s196, 1
    %p200 = scmp.eq.s32.totalorder %s15, 2
    %p201 = scmp.ne.s32.totalorder %s196, %s198
    %p202 = scmp.eq.s32.totalorder %s15, 0
    %p203 = por %p201, %p202
    %p204 = scmp.ne.s32.totalorder %s196, %s198
    %p205 = scmp.eq.s32.totalorder %s20, 2
    %p206 = por %p204, %p205
    %p207 = scmp.ne.s32.totalorder %s198, %s199
    %p208 = scmp.eq.s32.totalorder %s20, 0
    %p209 = por %p207, %p208
    %p210 = scmp.ne.s32.totalorder %s198, %s199
    %p211 = scmp.eq.s32.totalorder %s21, 2
    %p212 = por %p210, %p211
    %p214 = scmp.ne.s32.totalorder %s199, %s213
    %p215 = scmp.eq.s32.totalorder %s21, 0
    %p216 = por %p214, %p215
    %s217 = ssub.s32 %s15, %s22
    %p218 = scmp.eq.s32.totalorder %s217, 0
    %s220 = sadd.s32 %s219, 1
    %s221 = scalar_select %p218, %s219, %s220
    %p224 = pneg %p218
    %p225 = scmp.eq.s32.totalorder %s15, 2
    %p226 = por %p224, %p225
    %p227 = scmp.ne.s32.totalorder %s219, %s222
    %p228 = scmp.eq.s32.totalorder %s15, 0
    %p229 = por %p227, %p228
    %p230 = scmp.ne.s32.totalorder %s219, %s222
    %p231 = scmp.eq.s32.totalorder %s20, 2
    %p232 = por %p230, %p231
    %p233 = scmp.ne.s32.totalorder %s222, %s223
    %p234 = scmp.eq.s32.totalorder %s20, 0
    %p235 = por %p233, %p234
    %p236 = scmp.ne.s32.totalorder %s222, %s223
    %p237 = scmp.eq.s32.totalorder %s21, 2
    %p238 = por %p236, %p237
    %p240 = scmp.ne.s32.totalorder %s223, %s239
    %p241 = scmp.eq.s32.totalorder %s21, 0
    %p242 = por %p240, %p241
    %p243 = scmp.le.s32.totalorder 1, %s15
    %p244 = scmp.lt.s32.totalorder %s15, 4
    %p245 = pnand %p243, %p244
    %p246 = pneg %p245
    // Predicated region
    $region9: #{tpu_custom_call.1} parent=5 // pred_check
      _
    $region10: #{tpu_custom_call.1} parent=5 // pred_check_branch
      %248 = sbr.rel (%p245) target = $region12
    $region11: #{tpu_custom_call.1} parent=5 // pred_region
      %s249 = ssub.s32 %s15, 1
      // Predicated region
      $region13: #{tpu_custom_call.1} parent=11 // pred_check
        %p250 = pneg %p62
      $region14: #{tpu_custom_call.1} parent=11 // pred_check_branch
        %252 = sbr.rel (%p250) target = $region16
      $region15: #{tpu_custom_call.1} parent=11 // pred_region
        _
      $region16: #{tpu_custom_call.1} parent=11 // pred_fallthru
        _
      // Predicated region
      $region17: #{tpu_custom_call.1} parent=11 // pred_check
        %p253 = pneg %p83
      $region18: #{tpu_custom_call.1} parent=11 // pred_check_branch
        %255 = sbr.rel (%p253) target = $region20
      $region19: #{tpu_custom_call.1} parent=11 // pred_region
        _
      $region20: #{tpu_custom_call.1} parent=11 // pred_fallthru
        _
      // Predicated region
      $region21: #{tpu_custom_call.1} parent=11 // pred_check
        %p256 = pneg %p104
      $region22: #{tpu_custom_call.1} parent=11 // pred_check_branch
        %258 = sbr.rel (%p256) target = $region24
      $region23: #{tpu_custom_call.1} parent=11 // pred_region
        _
      $region24: #{tpu_custom_call.1} parent=11 // pred_fallthru
        _
      // Predicated region
      $region25: #{tpu_custom_call.1} parent=11 // pred_check
        %p259 = pneg %p125
      $region26: #{tpu_custom_call.1} parent=11 // pred_check_branch
        %261 = sbr.rel (%p259) target = $region28
      $region27: #{tpu_custom_call.1} parent=11 // pred_region
        _
      $region28: #{tpu_custom_call.1} parent=11 // pred_fallthru
        _
      // Predicated region
      $region29: #{tpu_custom_call.1} parent=11 // pred_check
        %p262 = pneg %p146
      $region30: #{tpu_custom_call.1} parent=11 // pred_check_branch
        %264 = sbr.rel (%p262) target = $region32
      $region31: #{tpu_custom_call.1} parent=11 // pred_region
        _
      $region32: #{tpu_custom_call.1} parent=11 // pred_fallthru
        _
      // Predicated region
      $region33: #{tpu_custom_call.1} parent=11 // pred_check
        %p265 = pneg %p167
      $region34: #{tpu_custom_call.1} parent=11 // pred_check_branch
        %267 = sbr.rel (%p265) target = $region36
      $region35: #{tpu_custom_call.1} parent=11 // pred_region
        _
      $region36: #{tpu_custom_call.1} parent=11 // pred_fallthru
        _
      // Predicated region
      $region37: #{tpu_custom_call.1} parent=11 // pred_check
        %p268 = pneg %p188
      $region38: #{tpu_custom_call.1} parent=11 // pred_check_branch
        %270 = sbr.rel (%p268) target = $region40
      $region39: #{tpu_custom_call.1} parent=11 // pred_region
        _
      $region40: #{tpu_custom_call.1} parent=11 // pred_fallthru
        _
      // Predicated region
      $region41: #{tpu_custom_call.1} parent=11 // pred_check
        %p271 = pneg %p209
      $region42: #{tpu_custom_call.1} parent=11 // pred_check_branch
        %273 = sbr.rel (%p271) target = $region44
      $region43: #{tpu_custom_call.1} parent=11 // pred_region
        _
      $region44: #{tpu_custom_call.1} parent=11 // pred_fallthru
        _
    $region12: #{tpu_custom_call.1} parent=5 // pred_fallthru
      _
    %p274 = scmp.lt.s32.totalorder %s15, 3
    // Predicated region
    $region45: #{tpu_custom_call.1} parent=5 // pred_check
      %p275 = pneg %p274
    $region46: #{tpu_custom_call.1} parent=5 // pred_check_branch
      %277 = sbr.rel (%p275) target = $region48
    $region47: #{tpu_custom_call.1} parent=5 // pred_region
      // Predicated region
      $region49: #{tpu_custom_call.1} parent=47 // pred_check
        %p278 = pneg %p35
      $region50: #{tpu_custom_call.1} parent=47 // pred_check_branch
        %280 = sbr.rel (%p278) target = $region52
      $region51: #{tpu_custom_call.1} parent=47 // pred_region
        %s281 = smul.u32 43, %s15
        %p282 = scmp.lt.s32.totalorder %s281, 128
        %s283 = scalar_select %p282, %s281, 128
        %s284 = smul.addr %s283, 8
        %s285 = scalar_lea.vmem %s0, %s284
        %s286 = smul.u32 43, %s15
      $region52: #{tpu_custom_call.1} parent=47 // pred_fallthru
        _
    $region48: #{tpu_custom_call.1} parent=5 // pred_fallthru
      _
    %p287 = scmp.le.s32.totalorder 1, %s15
    %p288 = scmp.lt.s32.totalorder %s15, 4
    %p289 = pnand %p287, %p288
    %p290 = pneg %p289
    // Predicated region
    $region53: #{tpu_custom_call.1} parent=5 // pred_check
      _
    $region54: #{tpu_custom_call.1} parent=5 // pred_check_branch
      %292 = sbr.rel (%p289) target = $region56
    $region55: #{tpu_custom_call.1} parent=5 // pred_region
      %s293 = ssub.s32 %s15, 1
      %s294 = smul.u32 43, %s20
      %p295 = scmp.lt.s32.totalorder %s294, 128
      %s296 = scalar_select %p295, %s294, 128
      %s297 = smul.addr %s296, 8
      %s298 = scalar_lea.vmem %s0, %s297
      %p299 = pneg %p41
      %p300 = pneg %p38
      %p301 = pneg %p62
      %p302 = pneg %p59
      %p303 = pneg %p83
      %p304 = pneg %p80
      %p305 = pneg %p104
      %p306 = pneg %p101
      %p307 = pneg %p125
      %p308 = pneg %p122
      %p309 = pneg %p146
      %p310 = pneg %p143
      %p311 = pneg %p167
      %p312 = pneg %p164
      %p313 = pneg %p188
      %p314 = pneg %p185
      %p315 = pneg %p209
      %p316 = pneg %p206
      %p317 = pneg %p235
      %p318 = pneg %p232
      %s319 = smul.u32 43, %s20
      %p320 = scmp.lt.s32.totalorder %s319, 128
      %s321 = scalar_select %p320, %s319, 128
      %s322 = smul.addr %s321, 8
      %s323 = scalar_lea.vmem %s9, %s322
      %s324 = smul.u32 43, %s20
      %p325 = scmp.lt.s32.totalorder %s324, 128
      %s326 = scalar_select %p325, %s324, 128
      %s327 = smul.addr %s326, 8
      %s328 = scalar_lea.vmem %s0, %s327
      %s329 = smul.u32 43, %s20
      %s330 = smul.u32 43, %s20
      %p331 = scmp.lt.s32.totalorder %s330, 128
      %s332 = scalar_select %p331, %s330, 128
      %s333 = smul.addr %s332, 8
      %s334 = scalar_lea.vmem %s9, %s333
      %s335 = smul.u32 43, %s20
      %v336 = vld [vmem:[%s328] sm:$0xff]
      %v337 = vld [vmem:[%s328 + $0x8] sm:$0xff]
      %v338 = vld [vmem:[%s328 + $0x10] sm:$0xff]
      %v339 = vld [vmem:[%s328 + $0x18] sm:$0xff]
      %v340 = vld [vmem:[%s328 + $0x20] sm:$0xff]
      %v341 = vld [vmem:[%s328 + $0x28] sm:$0xff]
      %v342 = vld [vmem:[%s328 + $0x30] sm:$0xff]
      %v343 = vld [vmem:[%s328 + $0x38] sm:$0xff]
      %v344 = vld [vmem:[%s328 + $0x40] sm:$0xff]
      %v345 = vld [vmem:[%s328 + $0x48] sm:$0xff]
      %v346 = vld [vmem:[%s328 + $0x50] sm:$0xff]
      %v347 = vld [vmem:[%s328 + $0x58] sm:$0xff]
      %v348 = vld [vmem:[%s328 + $0x60] sm:$0xff]
      %v349 = vld [vmem:[%s328 + $0x68] sm:$0xff]
      %v350 = vld [vmem:[%s328 + $0x70] sm:$0xff]
      %v351 = vld [vmem:[%s328 + $0x78] sm:$0xff]
      %v352 = vld [vmem:[%s328 + $0x80] sm:$0xff]
      %v353 = vld [vmem:[%s328 + $0x88] sm:$0xff]
      %v354 = vld [vmem:[%s328 + $0x90] sm:$0xff]
      %v355 = vld [vmem:[%s328 + $0x98] sm:$0xff]
      %v356 = vld [vmem:[%s328 + $0xa0] sm:$0xff]
      %v357 = vld [vmem:[%s328 + $0xa8] sm:$0xff]
      %v358 = vld [vmem:[%s328 + $0xb0] sm:$0xff]
      %v359 = vld [vmem:[%s328 + $0xb8] sm:$0xff]
      %v360 = vld [vmem:[%s328 + $0xc0] sm:$0xff]
      %v361 = vld [vmem:[%s328 + $0xc8] sm:$0xff]
      %v362 = vld [vmem:[%s328 + $0xd0] sm:$0xff]
      %v363 = vld [vmem:[%s328 + $0xd8] sm:$0xff]
      %v364 = vld [vmem:[%s328 + $0xe0] sm:$0xff]
      %v365 = vld [vmem:[%s328 + $0xe8] sm:$0xff]
      %v366 = vld [vmem:[%s328 + $0xf0] sm:$0xff]
      %v367 = vld [vmem:[%s328 + $0xf8] sm:$0xff]
      %v368 = vld [vmem:[%s328 + $0x100] sm:$0xff]
      %v369 = vld [vmem:[%s328 + $0x108] sm:$0xff]
      %v370 = vld [vmem:[%s328 + $0x110] sm:$0xff]
      %v371 = vld [vmem:[%s328 + $0x118] sm:$0xff]
      %v372 = vld [vmem:[%s328 + $0x120] sm:$0xff]
      %v373 = vld [vmem:[%s328 + $0x128] sm:$0xff]
      %v374 = vld [vmem:[%s328 + $0x130] sm:$0xff]
      %v375 = vld [vmem:[%s328 + $0x138] sm:$0xff]
      %v376 = vld [vmem:[%s328 + $0x140] sm:$0xff]
      %v377 = vld [vmem:[%s328 + $0x148] sm:$0xff]
      %v378 = vld [vmem:[%s328 + $0x150] sm:$0xff]
      %v379 = vld [vmem:[%s1] sm:$0xff]
      %v380 = vld [vmem:[%s1 + $0x8] sm:$0xff]
      %v381 = vld [vmem:[%s1 + $0x10] sm:$0xff]
      %v382 = vld [vmem:[%s1 + $0x18] sm:$0xff]
      %v383 = vld [vmem:[%s1 + $0x20] sm:$0xff]
      %v384 = vld [vmem:[%s1 + $0x28] sm:$0xff]
      %v385 = vld [vmem:[%s1 + $0x30] sm:$0xff]
      %v386 = vld [vmem:[%s1 + $0x38] sm:$0xff]
      %v387 = vld [vmem:[%s1 + $0x40] sm:$0x7f]
      %v388 = vld [vmem:[%s1 + $0x48] sm:$0x7f]
      %vm389 = vcmask 318464
      %v391 = vsel %vm389, %v336, 0
      %v394 = vsel %vm389, %v337, 0
      %v397 = vsel %vm389, %v338, 0
      %v400 = vsel %vm389, %v339, 0
      %v403 = vsel %vm389, %v340, 0
      %v406 = vsel %vm389, %v341, 0
      %v409 = vsel %vm389, %v342, 0
      %v412 = vsel %vm389, %v343, 0
      %v415 = vsel %vm389, %v344, 0
      %v418 = vsel %vm389, %v345, 0
      %v421 = vsel %vm389, %v346, 0
      %v424 = vsel %vm389, %v347, 0
      %v427 = vsel %vm389, %v348, 0
      %v430 = vsel %vm389, %v349, 0
      %v433 = vsel %vm389, %v350, 0
      %v436 = vsel %vm389, %v351, 0
      %v439 = vsel %vm389, %v352, 0
      %v442 = vsel %vm389, %v353, 0
      %v445 = vsel %vm389, %v354, 0
      %v448 = vsel %vm389, %v355, 0
      %v451 = vsel %vm389, %v356, 0
      %v454 = vsel %vm389, %v357, 0
      %v457 = vsel %vm389, %v358, 0
      %v460 = vsel %vm389, %v359, 0
      %v463 = vsel %vm389, %v360, 0
      %v466 = vsel %vm389, %v361, 0
      %v469 = vsel %vm389, %v362, 0
      %v472 = vsel %vm389, %v363, 0
      %v475 = vsel %vm389, %v364, 0
      %v478 = vsel %vm389, %v365, 0
      %v481 = vsel %vm389, %v366, 0
      %v484 = vsel %vm389, %v367, 0
      %v487 = vsel %vm389, %v368, 0
      %v490 = vsel %vm389, %v369, 0
      %v493 = vsel %vm389, %v370, 0
      %v496 = vsel %vm389, %v371, 0
      %v499 = vsel %vm389, %v372, 0
      %v502 = vsel %vm389, %v373, 0
      %v505 = vsel %vm389, %v374, 0
      %v508 = vsel %vm389, %v375, 0
      %v511 = vsel %vm389, %v376, 0
      %v514 = vsel %vm389, %v377, 0
      %v517 = vsel %vm389, %v378, 0
      %vm519 = vcmask 1046528
      %v521 = vsel %vm519, %v387, 0
      %v524 = vsel %vm519, %v388, 0
      %526 = vmatprep.subr.mxu0 0.0
      %527 = vmatpush1.msra.mxu0 0.0
      %528 = vmatprep.subr.mxu0 0.0
      %529 = vmatpush1.msra.mxu0 0.0
      %530 = vmatprep.subr.mxu0 0.0
      %531 = vmatpush1.msra.mxu0 0.0
      %532 = vmatprep.subr.mxu0 0.0
      %533 = vmatpush1.msra.mxu0 0.0
      %534 = vmatprep.subr.mxu0 0.0
      %535 = vmatpush1.msra.mxu0 0.0
      %536 = vmatprep.subr.mxu0 0.0
      %537 = vmatpush1.msra.mxu0 0.0
      %538 = vmatprep.subr.mxu0 0.0
      %539 = vmatpush1.msra.mxu0 0.0
      %540 = vmatprep.subr.mxu0 0.0
      %541 = vmatpush1.msra.mxu0 0.0
      %542 = vmatprep.subr.mxu0 0.0
      %543 = vmatpush1.msra.mxu0 0.0
      %544 = vmatprep.subr.mxu0 0.0
      %545 = vmatpush1.msra.mxu0 0.0
      %546 = vmatprep.subr.mxu0 0.0
      %547 = vmatpush1.msra.mxu0 0.0
      %548 = vmatprep.subr.mxu0 %v524
      %549 = vmatpush1.msra.mxu0 %v521
      %550 = vmatprep.subr.mxu0 %v386
      %551 = vmatpush1.msra.mxu0 %v385
      %552 = vmatprep.subr.mxu0 %v384
      %553 = vmatpush1.msra.mxu0 %v383
      %554 = vmatprep.subr.mxu0 %v382
      %555 = vmatpush1.msra.mxu0 %v381
      %556 = vmatprep.subr.mxu0 %v380
      %557 = vmatpush1.msra.mxu0 %v379
      %558 = vmatprep.subr.mxu0 0.0
      %559 = vmatpush2.msra.mxu0 0.0
      %560 = vmatprep.subr.mxu0 0.0
      %561 = vmatpush2.msra.mxu0 0.0
      %562 = vmatprep.subr.mxu0 0.0
      %563 = vmatpush2.msra.mxu0 0.0
      %564 = vmatprep.subr.mxu0 0.0
      %565 = vmatpush2.msra.mxu0 0.0
      %566 = vmatprep.subr.mxu0 0.0
      %567 = vmatpush2.msra.mxu0 0.0
      %568 = vmatprep.subr.mxu0 0.0
      %569 = vmatpush2.msra.mxu0 0.0
      %570 = vmatprep.subr.mxu0 0.0
      %571 = vmatpush2.msra.mxu0 0.0
      %572 = vmatprep.subr.mxu0 0.0
      %573 = vmatpush2.msra.mxu0 0.0
      %574 = vmatprep.subr.mxu0 0.0
      %575 = vmatpush2.msra.mxu0 0.0
      %576 = vmatprep.subr.mxu0 0.0
      %577 = vmatpush2.msra.mxu0 0.0
      %578 = vmatprep.subr.mxu0 0.0
      %579 = vmatpush2.msra.mxu0 0.0
      %580 = vmatprep.subr.mxu0 0.0
      %581 = vmatpush2.msra.mxu0 0.0
      %582 = vmatprep.subr.mxu0 0.0
      %583 = vmatpush2.msra.mxu0 0.0
      %584 = vmatprep.subr.mxu0 0.0
      %585 = vmatpush2.msra.mxu0 0.0
      %586 = vmatprep.subr.mxu0 0.0
      %587 = vmatpush2.msra.mxu0 0.0
      %588 = vmatprep.subr.mxu0 0.0
      %589 = vmatpush2.msra.mxu0 0.0
      %590 = vmatprep.mubr.f32.mxu0 0.0
      %591 = vmatmul.mubr.f32.gmra.mxu0 %v391
      %v592 = vpop.f32.mrf.mxu0
      %v593 = vadd.f32 0.0, %v592
      %v594 = vpop.f32.mrf.mxu0
      %v595 = vadd.f32 0.0, %v594
      %596 = vmatprep.mubr.f32.mxu0 0.0
      %597 = vmatmul.mubr.f32.gmra.mxu0 %v394
      %v598 = vpop.f32.mrf.mxu0
      %v599 = vadd.f32 0.0, %v598
      %v600 = vpop.f32.mrf.mxu0
      %v601 = vadd.f32 0.0, %v600
      %602 = vmatprep.mubr.f32.mxu0 0.0
      %603 = vmatmul.mubr.f32.gmra.mxu0 %v397
      %v604 = vpop.f32.mrf.mxu0
      %v605 = vadd.f32 0.0, %v604
      %v606 = vpop.f32.mrf.mxu0
      %v607 = vadd.f32 0.0, %v606
      %608 = vmatprep.mubr.f32.mxu0 0.0
      %609 = vmatmul.mubr.f32.gmra.mxu0 %v400
      %v610 = vpop.f32.mrf.mxu0
      %v611 = vadd.f32 0.0, %v610
      %v612 = vpop.f32.mrf.mxu0
      %v613 = vadd.f32 0.0, %v612
      %614 = vmatprep.mubr.f32.mxu0 0.0
      %615 = vmatmul.mubr.f32.gmra.mxu0 %v403
      %v616 = vpop.f32.mrf.mxu0
      %v617 = vadd.f32 0.0, %v616
      %v618 = vpop.f32.mrf.mxu0
      %v619 = vadd.f32 0.0, %v618
      %620 = vmatprep.mubr.f32.mxu0 0.0
      %621 = vmatmul.mubr.f32.gmra.mxu0 %v406
      %v622 = vpop.f32.mrf.mxu0
      %v623 = vadd.f32 0.0, %v622
      %v624 = vpop.f32.mrf.mxu0
      %v625 = vadd.f32 0.0, %v624
      %626 = vmatprep.mubr.f32.mxu0 0.0
      %627 = vmatmul.mubr.f32.gmra.mxu0 %v409
      %v628 = vpop.f32.mrf.mxu0
      %v629 = vadd.f32 0.0, %v628
      %v630 = vpop.f32.mrf.mxu0
      %v631 = vadd.f32 0.0, %v630
      %632 = vmatprep.mubr.f32.mxu0 0.0
      %633 = vmatmul.mubr.f32.gmra.mxu0 %v412
      %v634 = vpop.f32.mrf.mxu0
      %v635 = vadd.f32 0.0, %v634
      %v636 = vpop.f32.mrf.mxu0
      %v637 = vadd.f32 0.0, %v636
      %638 = vmatprep.mubr.f32.mxu0 0.0
      %639 = vmatmul.mubr.f32.gmra.mxu0 %v415
      %v640 = vpop.f32.mrf.mxu0
      %v641 = vadd.f32 0.0, %v640
      %v642 = vpop.f32.mrf.mxu0
      %v643 = vadd.f32 0.0, %v642
      %644 = vmatprep.mubr.f32.mxu0 0.0
      %645 = vmatmul.mubr.f32.gmra.mxu0 %v418
      %v646 = vpop.f32.mrf.mxu0
      %v647 = vadd.f32 0.0, %v646
      %v648 = vpop.f32.mrf.mxu0
      %v649 = vadd.f32 0.0, %v648
      %650 = vmatprep.mubr.f32.mxu0 0.0
      %651 = vmatmul.mubr.f32.gmra.mxu0 %v421
      %v652 = vpop.f32.mrf.mxu0
      %v653 = vadd.f32 0.0, %v652
      %v654 = vpop.f32.mrf.mxu0
      %v655 = vadd.f32 0.0, %v654
      %656 = vmatprep.mubr.f32.mxu0 0.0
      %657 = vmatmul.mubr.f32.gmra.mxu0 %v424
      %v658 = vpop.f32.mrf.mxu0
      %v659 = vadd.f32 0.0, %v658
      %v660 = vpop.f32.mrf.mxu0
      %v661 = vadd.f32 0.0, %v660
      %662 = vmatprep.mubr.f32.mxu0 0.0
      %663 = vmatmul.mubr.f32.gmra.mxu0 %v427
      %v664 = vpop.f32.mrf.mxu0
      %v665 = vadd.f32 0.0, %v664
      %v666 = vpop.f32.mrf.mxu0
      %v667 = vadd.f32 0.0, %v666
      %668 = vmatprep.mubr.f32.mxu0 0.0
      %669 = vmatmul.mubr.f32.gmra.mxu0 %v430
      %v670 = vpop.f32.mrf.mxu0
      %v671 = vadd.f32 0.0, %v670
      %v672 = vpop.f32.mrf.mxu0
      %v673 = vadd.f32 0.0, %v672
      %674 = vmatprep.mubr.f32.mxu0 0.0
      %675 = vmatmul.mubr.f32.gmra.mxu0 %v433
      %v676 = vpop.f32.mrf.mxu0
      %v677 = vadd.f32 0.0, %v676
      %v678 = vpop.f32.mrf.mxu0
      %v679 = vadd.f32 0.0, %v678
      %680 = vmatprep.mubr.f32.mxu0 0.0
      %681 = vmatmul.mubr.f32.gmra.mxu0 %v436
      %v682 = vpop.f32.mrf.mxu0
      %v683 = vadd.f32 0.0, %v682
      %v684 = vpop.f32.mrf.mxu0
      %v685 = vadd.f32 0.0, %v684
      %686 = vmatprep.mubr.f32.mxu0 0.0
      %687 = vmatmul.mubr.f32.gmra.mxu0 %v439
      %v688 = vpop.f32.mrf.mxu0
      %v689 = vadd.f32 0.0, %v688
      %v690 = vpop.f32.mrf.mxu0
      %v691 = vadd.f32 0.0, %v690
      %692 = vmatprep.mubr.f32.mxu0 0.0
      %693 = vmatmul.mubr.f32.gmra.mxu0 %v442
      %v694 = vpop.f32.mrf.mxu0
      %v695 = vadd.f32 0.0, %v694
      %v696 = vpop.f32.mrf.mxu0
      %v697 = vadd.f32 0.0, %v696
      %698 = vmatprep.mubr.f32.mxu0 0.0
      %699 = vmatmul.mubr.f32.gmra.mxu0 %v445
      %v700 = vpop.f32.mrf.mxu0
      %v701 = vadd.f32 0.0, %v700
      %v702 = vpop.f32.mrf.mxu0
      %v703 = vadd.f32 0.0, %v702
      %704 = vmatprep.mubr.f32.mxu0 0.0
      %705 = vmatmul.mubr.f32.gmra.mxu0 %v448
      %v706 = vpop.f32.mrf.mxu0
      %v707 = vadd.f32 0.0, %v706
      %v708 = vpop.f32.mrf.mxu0
      %v709 = vadd.f32 0.0, %v708
      %710 = vmatprep.mubr.f32.mxu0 0.0
      %711 = vmatmul.mubr.f32.gmra.mxu0 %v451
      %v712 = vpop.f32.mrf.mxu0
      %v713 = vadd.f32 0.0, %v712
      %v714 = vpop.f32.mrf.mxu0
      %v715 = vadd.f32 0.0, %v714
      %716 = vmatprep.mubr.f32.mxu0 0.0
      %717 = vmatmul.mubr.f32.gmra.mxu0 %v454
      %v718 = vpop.f32.mrf.mxu0
      %v719 = vadd.f32 0.0, %v718
      %v720 = vpop.f32.mrf.mxu0
      %v721 = vadd.f32 0.0, %v720
      %722 = vmatprep.mubr.f32.mxu0 0.0
      %723 = vmatmul.mubr.f32.gmra.mxu0 %v457
      %v724 = vpop.f32.mrf.mxu0
      %v725 = vadd.f32 0.0, %v724
      %v726 = vpop.f32.mrf.mxu0
      %v727 = vadd.f32 0.0, %v726
      %728 = vmatprep.mubr.f32.mxu0 0.0
      %729 = vmatmul.mubr.f32.gmra.mxu0 %v460
      %v730 = vpop.f32.mrf.mxu0
      %v731 = vadd.f32 0.0, %v730
      %v732 = vpop.f32.mrf.mxu0
      %v733 = vadd.f32 0.0, %v732
      %734 = vmatprep.mubr.f32.mxu0 0.0
      %735 = vmatmul.mubr.f32.gmra.mxu0 %v463
      %v736 = vpop.f32.mrf.mxu0
      %v737 = vadd.f32 0.0, %v736
      %v738 = vpop.f32.mrf.mxu0
      %v739 = vadd.f32 0.0, %v738
      %740 = vmatprep.mubr.f32.mxu0 0.0
      %741 = vmatmul.mubr.f32.gmra.mxu0 %v466
      %v742 = vpop.f32.mrf.mxu0
      %v743 = vadd.f32 0.0, %v742
      %v744 = vpop.f32.mrf.mxu0
      %v745 = vadd.f32 0.0, %v744
      %746 = vmatprep.mubr.f32.mxu0 0.0
      %747 = vmatmul.mubr.f32.gmra.mxu0 %v469
      %v748 = vpop.f32.mrf.mxu0
      %v749 = vadd.f32 0.0, %v748
      %v750 = vpop.f32.mrf.mxu0
      %v751 = vadd.f32 0.0, %v750
      %752 = vmatprep.mubr.f32.mxu0 0.0
      %753 = vmatmul.mubr.f32.gmra.mxu0 %v472
      %v754 = vpop.f32.mrf.mxu0
      %v755 = vadd.f32 0.0, %v754
      %v756 = vpop.f32.mrf.mxu0
      %v757 = vadd.f32 0.0, %v756
      %758 = vmatprep.mubr.f32.mxu0 0.0
      %759 = vmatmul.mubr.f32.gmra.mxu0 %v475
      %v760 = vpop.f32.mrf.mxu0
      %v761 = vadd.f32 0.0, %v760
      %v762 = vpop.f32.mrf.mxu0
      %v763 = vadd.f32 0.0, %v762
      %764 = vmatprep.mubr.f32.mxu0 0.0
      %765 = vmatmul.mubr.f32.gmra.mxu0 %v478
      %v766 = vpop.f32.mrf.mxu0
      %v767 = vadd.f32 0.0, %v766
      %v768 = vpop.f32.mrf.mxu0
      %v769 = vadd.f32 0.0, %v768
      %770 = vmatprep.mubr.f32.mxu0 0.0
      %771 = vmatmul.mubr.f32.gmra.mxu0 %v481
      %v772 = vpop.f32.mrf.mxu0
      %v773 = vadd.f32 0.0, %v772
      %v774 = vpop.f32.mrf.mxu0
      %v775 = vadd.f32 0.0, %v774
      %776 = vmatprep.mubr.f32.mxu0 0.0
      %777 = vmatmul.mubr.f32.gmra.mxu0 %v484
      %v778 = vpop.f32.mrf.mxu0
      %v779 = vadd.f32 0.0, %v778
      %v780 = vpop.f32.mrf.mxu0
      %v781 = vadd.f32 0.0, %v780
      %782 = vmatprep.mubr.f32.mxu0 0.0
      %783 = vmatmul.mubr.f32.gmra.mxu0 %v487
      %v784 = vpop.f32.mrf.mxu0
      %v785 = vadd.f32 0.0, %v784
      %v786 = vpop.f32.mrf.mxu0
      %v787 = vadd.f32 0.0, %v786
      %788 = vmatprep.mubr.f32.mxu0 0.0
      %789 = vmatmul.mubr.f32.gmra.mxu0 %v490
      %v790 = vpop.f32.mrf.mxu0
      %v791 = vadd.f32 0.0, %v790
      %v792 = vpop.f32.mrf.mxu0
      %v793 = vadd.f32 0.0, %v792
      %794 = vmatprep.mubr.f32.mxu0 0.0
      %795 = vmatmul.mubr.f32.gmra.mxu0 %v493
      %v796 = vpop.f32.mrf.mxu0
      %v797 = vadd.f32 0.0, %v796
      %v798 = vpop.f32.mrf.mxu0
      %v799 = vadd.f32 0.0, %v798
      %800 = vmatprep.mubr.f32.mxu0 0.0
      %801 = vmatmul.mubr.f32.gmra.mxu0 %v496
      %v802 = vpop.f32.mrf.mxu0
      %v803 = vadd.f32 0.0, %v802
      %v804 = vpop.f32.mrf.mxu0
      %v805 = vadd.f32 0.0, %v804
      %806 = vmatprep.mubr.f32.mxu0 0.0
      %807 = vmatmul.mubr.f32.gmra.mxu0 %v499
      %v808 = vpop.f32.mrf.mxu0
      %v809 = vadd.f32 0.0, %v808
      %v810 = vpop.f32.mrf.mxu0
      %v811 = vadd.f32 0.0, %v810
      %812 = vmatprep.mubr.f32.mxu0 0.0
      %813 = vmatmul.mubr.f32.gmra.mxu0 %v502
      %v814 = vpop.f32.mrf.mxu0
      %v815 = vadd.f32 0.0, %v814
      %v816 = vpop.f32.mrf.mxu0
      %v817 = vadd.f32 0.0, %v816
      %818 = vmatprep.mubr.f32.mxu0 0.0
      %819 = vmatmul.mubr.f32.gmra.mxu0 %v505
      %v820 = vpop.f32.mrf.mxu0
      %v821 = vadd.f32 0.0, %v820
      %v822 = vpop.f32.mrf.mxu0
      %v823 = vadd.f32 0.0, %v822
      %824 = vmatprep.mubr.f32.mxu0 0.0
      %825 = vmatmul.mubr.f32.gmra.mxu0 %v508
      %v826 = vpop.f32.mrf.mxu0
      %v827 = vadd.f32 0.0, %v826
      %v828 = vpop.f32.mrf.mxu0
      %v829 = vadd.f32 0.0, %v828
      %830 = vmatprep.mubr.f32.mxu0 0.0
      %831 = vmatmul.mubr.f32.gmra.mxu0 %v511
      %v832 = vpop.f32.mrf.mxu0
      %v833 = vadd.f32 0.0, %v832
      %v834 = vpop.f32.mrf.mxu0
      %v835 = vadd.f32 0.0, %v834
      %836 = vmatprep.mubr.f32.mxu0 0.0
      %837 = vmatmul.mubr.f32.gmra.mxu0 %v514
      %v838 = vpop.f32.mrf.mxu0
      %v839 = vadd.f32 0.0, %v838
      %v840 = vpop.f32.mrf.mxu0
      %v841 = vadd.f32 0.0, %v840
      %842 = vmatprep.mubr.f32.mxu0 0.0
      %843 = vmatmul.mubr.f32.gmra.mxu0 %v517
      %v844 = vpop.f32.mrf.mxu0
      %v845 = vadd.f32 0.0, %v844
      %v846 = vpop.f32.mrf.mxu0
      %v847 = vadd.f32 0.0, %v846
      %848 = vdwg.mxu0
      %v849 = vld [vmem:[%s2] sm:$0x1]
      %v851 = vlaneseq
      %v852 = vshrl.u32 %v851, 7
      %v853 = vsub.s32 0, %v852
      %v854 = vrot.slane %v849, %v853
      %v856 = vadd.f32 %v593, %v854
      %v857 = vadd.f32 %v599, %v854
      %v858 = vadd.f32 %v605, %v854
      %v859 = vadd.f32 %v611, %v854
      %v860 = vadd.f32 %v617, %v854
      %v861 = vadd.f32 %v623, %v854
      %v862 = vadd.f32 %v629, %v854
      %v863 = vadd.f32 %v635, %v854
      %v864 = vadd.f32 %v641, %v854
      %v865 = vadd.f32 %v647, %v854
      %v866 = vadd.f32 %v653, %v854
      %v867 = vadd.f32 %v659, %v854
      %v868 = vadd.f32 %v665, %v854
      %v869 = vadd.f32 %v671, %v854
      %v870 = vadd.f32 %v677, %v854
      %v871 = vadd.f32 %v683, %v854
      %v872 = vadd.f32 %v689, %v854
      %v873 = vadd.f32 %v695, %v854
      %v874 = vadd.f32 %v701, %v854
      %v875 = vadd.f32 %v707, %v854
      %v876 = vadd.f32 %v713, %v854
      %v877 = vadd.f32 %v719, %v854
      %v878 = vadd.f32 %v725, %v854
      %v879 = vadd.f32 %v731, %v854
      %v880 = vadd.f32 %v737, %v854
      %v881 = vadd.f32 %v743, %v854
      %v882 = vadd.f32 %v749, %v854
      %v883 = vadd.f32 %v755, %v854
      %v884 = vadd.f32 %v761, %v854
      %v885 = vadd.f32 %v767, %v854
      %v886 = vadd.f32 %v773, %v854
      %v887 = vadd.f32 %v779, %v854
      %v888 = vadd.f32 %v785, %v854
      %v889 = vadd.f32 %v791, %v854
      %v890 = vadd.f32 %v797, %v854
      %v891 = vadd.f32 %v803, %v854
      %v892 = vadd.f32 %v809, %v854
      %v893 = vadd.f32 %v815, %v854
      %v894 = vadd.f32 %v821, %v854
      %v895 = vadd.f32 %v827, %v854
      %v896 = vadd.f32 %v833, %v854
      %v897 = vadd.f32 %v839, %v854
      %v898 = vadd.f32 %v845, %v854
      %v899 = vmax.f32 %v856, 0.0
      %v900 = vmax.f32 %v857, 0.0
      %v901 = vmax.f32 %v858, 0.0
      %v902 = vmax.f32 %v859, 0.0
      %v903 = vmax.f32 %v860, 0.0
      %v904 = vmax.f32 %v861, 0.0
      %v905 = vmax.f32 %v862, 0.0
      %v906 = vmax.f32 %v863, 0.0
      %v907 = vmax.f32 %v864, 0.0
      %v908 = vmax.f32 %v865, 0.0
      %v909 = vmax.f32 %v866, 0.0
      %v910 = vmax.f32 %v867, 0.0
      %v911 = vmax.f32 %v868, 0.0
      %v912 = vmax.f32 %v869, 0.0
      %v913 = vmax.f32 %v870, 0.0
      %v914 = vmax.f32 %v871, 0.0
      %v915 = vmax.f32 %v872, 0.0
      %v916 = vmax.f32 %v873, 0.0
      %v917 = vmax.f32 %v874, 0.0
      %v918 = vmax.f32 %v875, 0.0
      %v919 = vmax.f32 %v876, 0.0
      %v920 = vmax.f32 %v877, 0.0
      %v921 = vmax.f32 %v878, 0.0
      %v922 = vmax.f32 %v879, 0.0
      %v923 = vmax.f32 %v880, 0.0
      %v924 = vmax.f32 %v881, 0.0
      %v925 = vmax.f32 %v882, 0.0
      %v926 = vmax.f32 %v883, 0.0
      %v927 = vmax.f32 %v884, 0.0
      %v928 = vmax.f32 %v885, 0.0
      %v929 = vmax.f32 %v886, 0.0
      %v930 = vmax.f32 %v887, 0.0
      %v931 = vmax.f32 %v888, 0.0
      %v932 = vmax.f32 %v889, 0.0
      %v933 = vmax.f32 %v890, 0.0
      %v934 = vmax.f32 %v891, 0.0
      %v935 = vmax.f32 %v892, 0.0
      %v936 = vmax.f32 %v893, 0.0
      %v937 = vmax.f32 %v894, 0.0
      %v938 = vmax.f32 %v895, 0.0
      %v939 = vmax.f32 %v896, 0.0
      %v940 = vmax.f32 %v897, 0.0
      %v941 = vmax.f32 %v898, 0.0
      %v942 = vld [vmem:[%s3] sm:$0xff]
      %v943 = vld [vmem:[%s3 + $0x8] sm:$0xff]
      %v944 = vld [vmem:[%s3 + $0x10] sm:$0xff]
      %v945 = vld [vmem:[%s3 + $0x18] sm:$0xff]
      %v946 = vld [vmem:[%s3 + $0x20] sm:$0xff]
      %v947 = vld [vmem:[%s3 + $0x28] sm:$0xff]
      %v948 = vld [vmem:[%s3 + $0x30] sm:$0xff]
      %v949 = vld [vmem:[%s3 + $0x38] sm:$0xff]
      %v950 = vld [vmem:[%s3 + $0x40] sm:$0xff]
      %v951 = vld [vmem:[%s3 + $0x48] sm:$0xff]
      %v952 = vld [vmem:[%s3 + $0x50] sm:$0xff]
      %v953 = vld [vmem:[%s3 + $0x58] sm:$0xff]
      %v954 = vld [vmem:[%s3 + $0x60] sm:$0xff]
      %v955 = vld [vmem:[%s3 + $0x68] sm:$0xff]
      %v956 = vld [vmem:[%s3 + $0x70] sm:$0xff]
      %v957 = vld [vmem:[%s3 + $0x78] sm:$0xff]
      %v958 = vld [vmem:[%s4] sm:$0x1]
      %v960 = vlaneseq
      %v961 = vshrl.u32 %v960, 7
      %v962 = vsub.s32 0, %v961
      %v963 = vrot.slane %v958, %v962
      %965 = vmatprep.subr.mxu0 0.0
      %966 = vmatpush1.msra.mxu0 %v957
      %967 = vmatprep.subr.mxu0 0.0
      %968 = vmatpush1.msra.mxu0 %v956
      %969 = vmatprep.subr.mxu0 0.0
      %970 = vmatpush1.msra.mxu0 %v955
      %971 = vmatprep.subr.mxu0 0.0
      %972 = vmatpush1.msra.mxu0 %v954
      %973 = vmatprep.subr.mxu0 0.0
      %974 = vmatpush1.msra.mxu0 %v953
      %975 = vmatprep.subr.mxu0 0.0
      %976 = vmatpush1.msra.mxu0 %v952
      %977 = vmatprep.subr.mxu0 0.0
      %978 = vmatpush1.msra.mxu0 %v951
      %979 = vmatprep.subr.mxu0 0.0
      %980 = vmatpush1.msra.mxu0 %v950
      %981 = vmatprep.subr.mxu0 0.0
      %982 = vmatpush1.msra.mxu0 %v949
      %983 = vmatprep.subr.mxu0 0.0
      %984 = vmatpush1.msra.mxu0 %v948
      %985 = vmatprep.subr.mxu0 0.0
      %986 = vmatpush1.msra.mxu0 %v947
      %987 = vmatprep.subr.mxu0 0.0
      %988 = vmatpush1.msra.mxu0 %v946
      %989 = vmatprep.subr.mxu0 0.0
      %990 = vmatpush1.msra.mxu0 %v945
      %991 = vmatprep.subr.mxu0 0.0
      %992 = vmatpush1.msra.mxu0 %v944
      %993 = vmatprep.subr.mxu0 0.0
      %994 = vmatpush1.msra.mxu0 %v943
      %995 = vmatprep.subr.mxu0 0.0
      %996 = vmatpush1.msra.mxu0 %v942
      %997 = vmatprep.subr.mxu0 0.0
      %998 = vmatpush2.msra.mxu0 0.0
      %999 = vmatprep.subr.mxu0 0.0
      %1000 = vmatpush2.msra.mxu0 0.0
      %1001 = vmatprep.subr.mxu0 0.0
      %1002 = vmatpush2.msra.mxu0 0.0
      %1003 = vmatprep.subr.mxu0 0.0
      %1004 = vmatpush2.msra.mxu0 0.0
      %1005 = vmatprep.subr.mxu0 0.0
      %1006 = vmatpush2.msra.mxu0 0.0
      %1007 = vmatprep.subr.mxu0 0.0
      %1008 = vmatpush2.msra.mxu0 0.0
      %1009 = vmatprep.subr.mxu0 0.0
      %1010 = vmatpush2.msra.mxu0 0.0
      %1011 = vmatprep.subr.mxu0 0.0
      %1012 = vmatpush2.msra.mxu0 0.0
      %1013 = vmatprep.subr.mxu0 0.0
      %1014 = vmatpush2.msra.mxu0 0.0
      %1015 = vmatprep.subr.mxu0 0.0
      %1016 = vmatpush2.msra.mxu0 0.0
      %1017 = vmatprep.subr.mxu0 0.0
      %1018 = vmatpush2.msra.mxu0 0.0
      %1019 = vmatprep.subr.mxu0 0.0
      %1020 = vmatpush2.msra.mxu0 0.0
      %1021 = vmatprep.subr.mxu0 0.0
      %1022 = vmatpush2.msra.mxu0 0.0
      %1023 = vmatprep.subr.mxu0 0.0
      %1024 = vmatpush2.msra.mxu0 0.0
      %1025 = vmatprep.subr.mxu0 0.0
      %1026 = vmatpush2.msra.mxu0 0.0
      %1027 = vmatprep.subr.mxu0 0.0
      %1028 = vmatpush2.msra.mxu0 0.0
      %1029 = vmatprep.mubr.f32.mxu0 0.0
      %1030 = vmatmul.mubr.f32.gmra.mxu0 %v899
      %v1031 = vpop.f32.mrf.mxu0
      %v1032 = vadd.f32 %v963, %v1031
      %v1033 = vpop.f32.mrf.mxu0
      %1034 = vmatprep.mubr.f32.mxu0 0.0
      %1035 = vmatmul.mubr.f32.gmra.mxu0 %v900
      %v1036 = vpop.f32.mrf.mxu0
      %v1037 = vadd.f32 %v963, %v1036
      %v1038 = vpop.f32.mrf.mxu0
      %1039 = vmatprep.mubr.f32.mxu0 0.0
      %1040 = vmatmul.mubr.f32.gmra.mxu0 %v901
      %v1041 = vpop.f32.mrf.mxu0
      %v1042 = vadd.f32 %v963, %v1041
      %v1043 = vpop.f32.mrf.mxu0
      %1044 = vmatprep.mubr.f32.mxu0 0.0
      %1045 = vmatmul.mubr.f32.gmra.mxu0 %v902
      %v1046 = vpop.f32.mrf.mxu0
      %v1047 = vadd.f32 %v963, %v1046
      %v1048 = vpop.f32.mrf.mxu0
      %1049 = vmatprep.mubr.f32.mxu0 0.0
      %1050 = vmatmul.mubr.f32.gmra.mxu0 %v903
      %v1051 = vpop.f32.mrf.mxu0
      %v1052 = vadd.f32 %v963, %v1051
      %v1053 = vpop.f32.mrf.mxu0
      %1054 = vmatprep.mubr.f32.mxu0 0.0
      %1055 = vmatmul.mubr.f32.gmra.mxu0 %v904
      %v1056 = vpop.f32.mrf.mxu0
      %v1057 = vadd.f32 %v963, %v1056
      %v1058 = vpop.f32.mrf.mxu0
      %1059 = vmatprep.mubr.f32.mxu0 0.0
      %1060 = vmatmul.mubr.f32.gmra.mxu0 %v905
      %v1061 = vpop.f32.mrf.mxu0
      %v1062 = vadd.f32 %v963, %v1061
      %v1063 = vpop.f32.mrf.mxu0
      %1064 = vmatprep.mubr.f32.mxu0 0.0
      %1065 = vmatmul.mubr.f32.gmra.mxu0 %v906
      %v1066 = vpop.f32.mrf.mxu0
      %v1067 = vadd.f32 %v963, %v1066
      %v1068 = vpop.f32.mrf.mxu0
      %1069 = vmatprep.mubr.f32.mxu0 0.0
      %1070 = vmatmul.mubr.f32.gmra.mxu0 %v907
      %v1071 = vpop.f32.mrf.mxu0
      %v1072 = vadd.f32 %v963, %v1071
      %v1073 = vpop.f32.mrf.mxu0
      %1074 = vmatprep.mubr.f32.mxu0 0.0
      %1075 = vmatmul.mubr.f32.gmra.mxu0 %v908
      %v1076 = vpop.f32.mrf.mxu0
      %v1077 = vadd.f32 %v963, %v1076
      %v1078 = vpop.f32.mrf.mxu0
      %1079 = vmatprep.mubr.f32.mxu0 0.0
      %1080 = vmatmul.mubr.f32.gmra.mxu0 %v909
      %v1081 = vpop.f32.mrf.mxu0
      %v1082 = vadd.f32 %v963, %v1081
      %v1083 = vpop.f32.mrf.mxu0
      %1084 = vmatprep.mubr.f32.mxu0 0.0
      %1085 = vmatmul.mubr.f32.gmra.mxu0 %v910
      %v1086 = vpop.f32.mrf.mxu0
      %v1087 = vadd.f32 %v963, %v1086
      %v1088 = vpop.f32.mrf.mxu0
      %1089 = vmatprep.mubr.f32.mxu0 0.0
      %1090 = vmatmul.mubr.f32.gmra.mxu0 %v911
      %v1091 = vpop.f32.mrf.mxu0
      %v1092 = vadd.f32 %v963, %v1091
      %v1093 = vpop.f32.mrf.mxu0
      %1094 = vmatprep.mubr.f32.mxu0 0.0
      %1095 = vmatmul.mubr.f32.gmra.mxu0 %v912
      %v1096 = vpop.f32.mrf.mxu0
      %v1097 = vadd.f32 %v963, %v1096
      %v1098 = vpop.f32.mrf.mxu0
      %1099 = vmatprep.mubr.f32.mxu0 0.0
      %1100 = vmatmul.mubr.f32.gmra.mxu0 %v913
      %v1101 = vpop.f32.mrf.mxu0
      %v1102 = vadd.f32 %v963, %v1101
      %v1103 = vpop.f32.mrf.mxu0
      %1104 = vmatprep.mubr.f32.mxu0 0.0
      %1105 = vmatmul.mubr.f32.gmra.mxu0 %v914
      %v1106 = vpop.f32.mrf.mxu0
      %v1107 = vadd.f32 %v963, %v1106
      %v1108 = vpop.f32.mrf.mxu0
      %1109 = vmatprep.mubr.f32.mxu0 0.0
      %1110 = vmatmul.mubr.f32.gmra.mxu0 %v915
      %v1111 = vpop.f32.mrf.mxu0
      %v1112 = vadd.f32 %v963, %v1111
      %v1113 = vpop.f32.mrf.mxu0
      %1114 = vmatprep.mubr.f32.mxu0 0.0
      %1115 = vmatmul.mubr.f32.gmra.mxu0 %v916
      %v1116 = vpop.f32.mrf.mxu0
      %v1117 = vadd.f32 %v963, %v1116
      %v1118 = vpop.f32.mrf.mxu0
      %1119 = vmatprep.mubr.f32.mxu0 0.0
      %1120 = vmatmul.mubr.f32.gmra.mxu0 %v917
      %v1121 = vpop.f32.mrf.mxu0
      %v1122 = vadd.f32 %v963, %v1121
      %v1123 = vpop.f32.mrf.mxu0
      %1124 = vmatprep.mubr.f32.mxu0 0.0
      %1125 = vmatmul.mubr.f32.gmra.mxu0 %v918
      %v1126 = vpop.f32.mrf.mxu0
      %v1127 = vadd.f32 %v963, %v1126
      %v1128 = vpop.f32.mrf.mxu0
      %1129 = vmatprep.mubr.f32.mxu0 0.0
      %1130 = vmatmul.mubr.f32.gmra.mxu0 %v919
      %v1131 = vpop.f32.mrf.mxu0
      %v1132 = vadd.f32 %v963, %v1131
      %v1133 = vpop.f32.mrf.mxu0
      %1134 = vmatprep.mubr.f32.mxu0 0.0
      %1135 = vmatmul.mubr.f32.gmra.mxu0 %v920
      %v1136 = vpop.f32.mrf.mxu0
      %v1137 = vadd.f32 %v963, %v1136
      %v1138 = vpop.f32.mrf.mxu0
      %1139 = vmatprep.mubr.f32.mxu0 0.0
      %1140 = vmatmul.mubr.f32.gmra.mxu0 %v921
      %v1141 = vpop.f32.mrf.mxu0
      %v1142 = vadd.f32 %v963, %v1141
      %v1143 = vpop.f32.mrf.mxu0
      %1144 = vmatprep.mubr.f32.mxu0 0.0
      %1145 = vmatmul.mubr.f32.gmra.mxu0 %v922
      %v1146 = vpop.f32.mrf.mxu0
      %v1147 = vadd.f32 %v963, %v1146
      %v1148 = vpop.f32.mrf.mxu0
      %1149 = vmatprep.mubr.f32.mxu0 0.0
      %1150 = vmatmul.mubr.f32.gmra.mxu0 %v923
      %v1151 = vpop.f32.mrf.mxu0
      %v1152 = vadd.f32 %v963, %v1151
      %v1153 = vpop.f32.mrf.mxu0
      %1154 = vmatprep.mubr.f32.mxu0 0.0
      %1155 = vmatmul.mubr.f32.gmra.mxu0 %v924
      %v1156 = vpop.f32.mrf.mxu0
      %v1157 = vadd.f32 %v963, %v1156
      %v1158 = vpop.f32.mrf.mxu0
      %1159 = vmatprep.mubr.f32.mxu0 0.0
      %1160 = vmatmul.mubr.f32.gmra.mxu0 %v925
      %v1161 = vpop.f32.mrf.mxu0
      %v1162 = vadd.f32 %v963, %v1161
      %v1163 = vpop.f32.mrf.mxu0
      %1164 = vmatprep.mubr.f32.mxu0 0.0
      %1165 = vmatmul.mubr.f32.gmra.mxu0 %v926
      %v1166 = vpop.f32.mrf.mxu0
      %v1167 = vadd.f32 %v963, %v1166
      %v1168 = vpop.f32.mrf.mxu0
      %1169 = vmatprep.mubr.f32.mxu0 0.0
      %1170 = vmatmul.mubr.f32.gmra.mxu0 %v927
      %v1171 = vpop.f32.mrf.mxu0
      %v1172 = vadd.f32 %v963, %v1171
      %v1173 = vpop.f32.mrf.mxu0
      %1174 = vmatprep.mubr.f32.mxu0 0.0
      %1175 = vmatmul.mubr.f32.gmra.mxu0 %v928
      %v1176 = vpop.f32.mrf.mxu0
      %v1177 = vadd.f32 %v963, %v1176
      %v1178 = vpop.f32.mrf.mxu0
      %1179 = vmatprep.mubr.f32.mxu0 0.0
      %1180 = vmatmul.mubr.f32.gmra.mxu0 %v929
      %v1181 = vpop.f32.mrf.mxu0
      %v1182 = vadd.f32 %v963, %v1181
      %v1183 = vpop.f32.mrf.mxu0
      %1184 = vmatprep.mubr.f32.mxu0 0.0
      %1185 = vmatmul.mubr.f32.gmra.mxu0 %v930
      %v1186 = vpop.f32.mrf.mxu0
      %v1187 = vadd.f32 %v963, %v1186
      %v1188 = vpop.f32.mrf.mxu0
      %1189 = vmatprep.mubr.f32.mxu0 0.0
      %1190 = vmatmul.mubr.f32.gmra.mxu0 %v931
      %v1191 = vpop.f32.mrf.mxu0
      %v1192 = vadd.f32 %v963, %v1191
      %v1193 = vpop.f32.mrf.mxu0
      %1194 = vmatprep.mubr.f32.mxu0 0.0
      %1195 = vmatmul.mubr.f32.gmra.mxu0 %v932
      %v1196 = vpop.f32.mrf.mxu0
      %v1197 = vadd.f32 %v963, %v1196
      %v1198 = vpop.f32.mrf.mxu0
      %1199 = vmatprep.mubr.f32.mxu0 0.0
      %1200 = vmatmul.mubr.f32.gmra.mxu0 %v933
      %v1201 = vpop.f32.mrf.mxu0
      %v1202 = vadd.f32 %v963, %v1201
      %v1203 = vpop.f32.mrf.mxu0
      %1204 = vmatprep.mubr.f32.mxu0 0.0
      %1205 = vmatmul.mubr.f32.gmra.mxu0 %v934
      %v1206 = vpop.f32.mrf.mxu0
      %v1207 = vadd.f32 %v963, %v1206
      %v1208 = vpop.f32.mrf.mxu0
      %1209 = vmatprep.mubr.f32.mxu0 0.0
      %1210 = vmatmul.mubr.f32.gmra.mxu0 %v935
      %v1211 = vpop.f32.mrf.mxu0
      %v1212 = vadd.f32 %v963, %v1211
      %v1213 = vpop.f32.mrf.mxu0
      %1214 = vmatprep.mubr.f32.mxu0 0.0
      %1215 = vmatmul.mubr.f32.gmra.mxu0 %v936
      %v1216 = vpop.f32.mrf.mxu0
      %v1217 = vadd.f32 %v963, %v1216
      %v1218 = vpop.f32.mrf.mxu0
      %1219 = vmatprep.mubr.f32.mxu0 0.0
      %1220 = vmatmul.mubr.f32.gmra.mxu0 %v937
      %v1221 = vpop.f32.mrf.mxu0
      %v1222 = vadd.f32 %v963, %v1221
      %v1223 = vpop.f32.mrf.mxu0
      %1224 = vmatprep.mubr.f32.mxu0 0.0
      %1225 = vmatmul.mubr.f32.gmra.mxu0 %v938
      %v1226 = vpop.f32.mrf.mxu0
      %v1227 = vadd.f32 %v963, %v1226
      %v1228 = vpop.f32.mrf.mxu0
      %1229 = vmatprep.mubr.f32.mxu0 0.0
      %1230 = vmatmul.mubr.f32.gmra.mxu0 %v939
      %v1231 = vpop.f32.mrf.mxu0
      %v1232 = vadd.f32 %v963, %v1231
      %v1233 = vpop.f32.mrf.mxu0
      %1234 = vmatprep.mubr.f32.mxu0 0.0
      %1235 = vmatmul.mubr.f32.gmra.mxu0 %v940
      %v1236 = vpop.f32.mrf.mxu0
      %v1237 = vadd.f32 %v963, %v1236
      %v1238 = vpop.f32.mrf.mxu0
      %1239 = vmatprep.mubr.f32.mxu0 0.0
      %1240 = vmatmul.mubr.f32.gmra.mxu0 %v941
      %v1241 = vpop.f32.mrf.mxu0
      %v1242 = vadd.f32 %v963, %v1241
      %v1243 = vpop.f32.mrf.mxu0
      %1244 = vdwg.mxu0
      %v1245 = vmax.f32 %v1032, 0.0
      %v1246 = vmax.f32 %v1037, 0.0
      %v1247 = vmax.f32 %v1042, 0.0
      %v1248 = vmax.f32 %v1047, 0.0
      %v1249 = vmax.f32 %v1052, 0.0
      %v1250 = vmax.f32 %v1057, 0.0
      %v1251 = vmax.f32 %v1062, 0.0
      %v1252 = vmax.f32 %v1067, 0.0
      %v1253 = vmax.f32 %v1072, 0.0
      %v1254 = vmax.f32 %v1077, 0.0
      %v1255 = vmax.f32 %v1082, 0.0
      %v1256 = vmax.f32 %v1087, 0.0
      %v1257 = vmax.f32 %v1092, 0.0
      %v1258 = vmax.f32 %v1097, 0.0
      %v1259 = vmax.f32 %v1102, 0.0
      %v1260 = vmax.f32 %v1107, 0.0
      %v1261 = vmax.f32 %v1112, 0.0
      %v1262 = vmax.f32 %v1117, 0.0
      %v1263 = vmax.f32 %v1122, 0.0
      %v1264 = vmax.f32 %v1127, 0.0
      %v1265 = vmax.f32 %v1132, 0.0
      %v1266 = vmax.f32 %v1137, 0.0
      %v1267 = vmax.f32 %v1142, 0.0
      %v1268 = vmax.f32 %v1147, 0.0
      %v1269 = vmax.f32 %v1152, 0.0
      %v1270 = vmax.f32 %v1157, 0.0
      %v1271 = vmax.f32 %v1162, 0.0
      %v1272 = vmax.f32 %v1167, 0.0
      %v1273 = vmax.f32 %v1172, 0.0
      %v1274 = vmax.f32 %v1177, 0.0
      %v1275 = vmax.f32 %v1182, 0.0
      %v1276 = vmax.f32 %v1187, 0.0
      %v1277 = vmax.f32 %v1192, 0.0
      %v1278 = vmax.f32 %v1197, 0.0
      %v1279 = vmax.f32 %v1202, 0.0
      %v1280 = vmax.f32 %v1207, 0.0
      %v1281 = vmax.f32 %v1212, 0.0
      %v1282 = vmax.f32 %v1217, 0.0
      %v1283 = vmax.f32 %v1222, 0.0
      %v1284 = vmax.f32 %v1227, 0.0
      %v1285 = vmax.f32 %v1232, 0.0
      %v1286 = vmax.f32 %v1237, 0.0
      %v1287 = vmax.f32 %v1242, 0.0
      %v1288 = vld [vmem:[%s5] sm:$0xff]
      %v1289 = vld [vmem:[%s5 + $0x8] sm:$0xff]
      %v1290 = vld [vmem:[%s5 + $0x10] sm:$0xff]
      %v1291 = vld [vmem:[%s5 + $0x18] sm:$0xff]
      %v1292 = vld [vmem:[%s5 + $0x20] sm:$0xff]
      %v1293 = vld [vmem:[%s5 + $0x28] sm:$0xff]
      %v1294 = vld [vmem:[%s5 + $0x30] sm:$0xff]
      %v1295 = vld [vmem:[%s5 + $0x38] sm:$0xff]
      %v1296 = vld [vmem:[%s5 + $0x40] sm:$0xff]
      %v1297 = vld [vmem:[%s5 + $0x48] sm:$0xff]
      %v1298 = vld [vmem:[%s5 + $0x50] sm:$0xff]
      %v1299 = vld [vmem:[%s5 + $0x58] sm:$0xff]
      %v1300 = vld [vmem:[%s5 + $0x60] sm:$0xff]
      %v1301 = vld [vmem:[%s5 + $0x68] sm:$0xff]
      %v1302 = vld [vmem:[%s5 + $0x70] sm:$0xff]
      %v1303 = vld [vmem:[%s5 + $0x78] sm:$0xff]
      %1304 = vmatprep.subr.mxu0 0.0
      %1305 = vmatpush1.msra.mxu0 %v1303
      %1306 = vmatprep.subr.mxu0 0.0
      %1307 = vmatpush1.msra.mxu0 %v1302
      %1308 = vmatprep.subr.mxu0 0.0
      %1309 = vmatpush1.msra.mxu0 %v1301
      %1310 = vmatprep.subr.mxu0 0.0
      %1311 = vmatpush1.msra.mxu0 %v1300
      %1312 = vmatprep.subr.mxu0 0.0
      %1313 = vmatpush1.msra.mxu0 %v1299
      %1314 = vmatprep.subr.mxu0 0.0
      %1315 = vmatpush1.msra.mxu0 %v1298
      %1316 = vmatprep.subr.mxu0 0.0
      %1317 = vmatpush1.msra.mxu0 %v1297
      %1318 = vmatprep.subr.mxu0 0.0
      %1319 = vmatpush1.msra.mxu0 %v1296
      %1320 = vmatprep.subr.mxu0 0.0
      %1321 = vmatpush1.msra.mxu0 %v1295
      %1322 = vmatprep.subr.mxu0 0.0
      %1323 = vmatpush1.msra.mxu0 %v1294
      %1324 = vmatprep.subr.mxu0 0.0
      %1325 = vmatpush1.msra.mxu0 %v1293
      %1326 = vmatprep.subr.mxu0 0.0
      %1327 = vmatpush1.msra.mxu0 %v1292
      %1328 = vmatprep.subr.mxu0 0.0
      %1329 = vmatpush1.msra.mxu0 %v1291
      %1330 = vmatprep.subr.mxu0 0.0
      %1331 = vmatpush1.msra.mxu0 %v1290
      %1332 = vmatprep.subr.mxu0 0.0
      %1333 = vmatpush1.msra.mxu0 %v1289
      %1334 = vmatprep.subr.mxu0 0.0
      %1335 = vmatpush1.msra.mxu0 %v1288
      %1336 = vmatprep.subr.mxu0 0.0
      %1337 = vmatpush2.msra.mxu0 0.0
      %1338 = vmatprep.subr.mxu0 0.0
      %1339 = vmatpush2.msra.mxu0 0.0
      %1340 = vmatprep.subr.mxu0 0.0
      %1341 = vmatpush2.msra.mxu0 0.0
      %1342 = vmatprep.subr.mxu0 0.0
      %1343 = vmatpush2.msra.mxu0 0.0
      %1344 = vmatprep.subr.mxu0 0.0
      %1345 = vmatpush2.msra.mxu0 0.0
      %1346 = vmatprep.subr.mxu0 0.0
      %1347 = vmatpush2.msra.mxu0 0.0
      %1348 = vmatprep.subr.mxu0 0.0
      %1349 = vmatpush2.msra.mxu0 0.0
      %1350 = vmatprep.subr.mxu0 0.0
      %1351 = vmatpush2.msra.mxu0 0.0
      %1352 = vmatprep.subr.mxu0 0.0
      %1353 = vmatpush2.msra.mxu0 0.0
      %1354 = vmatprep.subr.mxu0 0.0
      %1355 = vmatpush2.msra.mxu0 0.0
      %1356 = vmatprep.subr.mxu0 0.0
      %1357 = vmatpush2.msra.mxu0 0.0
      %1358 = vmatprep.subr.mxu0 0.0
      %1359 = vmatpush2.msra.mxu0 0.0
      %1360 = vmatprep.subr.mxu0 0.0
      %1361 = vmatpush2.msra.mxu0 0.0
      %1362 = vmatprep.subr.mxu0 0.0
      %1363 = vmatpush2.msra.mxu0 0.0
      %1364 = vmatprep.subr.mxu0 0.0
      %1365 = vmatpush2.msra.mxu0 0.0
      %1366 = vmatprep.subr.mxu0 0.0
      %1367 = vmatpush2.msra.mxu0 0.0
      %1368 = vmatprep.mubr.f32.mxu0 0.0
      %1369 = vmatmul.mubr.f32.gmra.mxu0 %v1245
      %v1370 = vpop.f32.mrf.mxu0
      %v1371 = vadd.f32 %v595, %v1370
      %v1372 = vpop.f32.mrf.mxu0
      %1373 = vmatprep.mubr.f32.mxu0 0.0
      %1374 = vmatmul.mubr.f32.gmra.mxu0 %v1246
      %v1375 = vpop.f32.mrf.mxu0
      %v1376 = vadd.f32 %v601, %v1375
      %v1377 = vpop.f32.mrf.mxu0
      %1378 = vmatprep.mubr.f32.mxu0 0.0
      %1379 = vmatmul.mubr.f32.gmra.mxu0 %v1247
      %v1380 = vpop.f32.mrf.mxu0
      %v1381 = vadd.f32 %v607, %v1380
      %v1382 = vpop.f32.mrf.mxu0
      %1383 = vmatprep.mubr.f32.mxu0 0.0
      %1384 = vmatmul.mubr.f32.gmra.mxu0 %v1248
      %v1385 = vpop.f32.mrf.mxu0
      %v1386 = vadd.f32 %v613, %v1385
      %v1387 = vpop.f32.mrf.mxu0
      %1388 = vmatprep.mubr.f32.mxu0 0.0
      %1389 = vmatmul.mubr.f32.gmra.mxu0 %v1249
      %v1390 = vpop.f32.mrf.mxu0
      %v1391 = vadd.f32 %v619, %v1390
      %v1392 = vpop.f32.mrf.mxu0
      %1393 = vmatprep.mubr.f32.mxu0 0.0
      %1394 = vmatmul.mubr.f32.gmra.mxu0 %v1250
      %v1395 = vpop.f32.mrf.mxu0
      %v1396 = vadd.f32 %v625, %v1395
      %v1397 = vpop.f32.mrf.mxu0
      %1398 = vmatprep.mubr.f32.mxu0 0.0
      %1399 = vmatmul.mubr.f32.gmra.mxu0 %v1251
      %v1400 = vpop.f32.mrf.mxu0
      %v1401 = vadd.f32 %v631, %v1400
      %v1402 = vpop.f32.mrf.mxu0
      %1403 = vmatprep.mubr.f32.mxu0 0.0
      %1404 = vmatmul.mubr.f32.gmra.mxu0 %v1252
      %v1405 = vpop.f32.mrf.mxu0
      %v1406 = vadd.f32 %v637, %v1405
      %v1407 = vpop.f32.mrf.mxu0
      %1408 = vmatprep.mubr.f32.mxu0 0.0
      %1409 = vmatmul.mubr.f32.gmra.mxu0 %v1253
      %v1410 = vpop.f32.mrf.mxu0
      %v1411 = vadd.f32 %v643, %v1410
      %v1412 = vpop.f32.mrf.mxu0
      %1413 = vmatprep.mubr.f32.mxu0 0.0
      %1414 = vmatmul.mubr.f32.gmra.mxu0 %v1254
      %v1415 = vpop.f32.mrf.mxu0
      %v1416 = vadd.f32 %v649, %v1415
      %v1417 = vpop.f32.mrf.mxu0
      %1418 = vmatprep.mubr.f32.mxu0 0.0
      %1419 = vmatmul.mubr.f32.gmra.mxu0 %v1255
      %v1420 = vpop.f32.mrf.mxu0
      %v1421 = vadd.f32 %v655, %v1420
      %v1422 = vpop.f32.mrf.mxu0
      %1423 = vmatprep.mubr.f32.mxu0 0.0
      %1424 = vmatmul.mubr.f32.gmra.mxu0 %v1256
      %v1425 = vpop.f32.mrf.mxu0
      %v1426 = vadd.f32 %v661, %v1425
      %v1427 = vpop.f32.mrf.mxu0
      %1428 = vmatprep.mubr.f32.mxu0 0.0
      %1429 = vmatmul.mubr.f32.gmra.mxu0 %v1257
      %v1430 = vpop.f32.mrf.mxu0
      %v1431 = vadd.f32 %v667, %v1430
      %v1432 = vpop.f32.mrf.mxu0
      %1433 = vmatprep.mubr.f32.mxu0 0.0
      %1434 = vmatmul.mubr.f32.gmra.mxu0 %v1258
      %v1435 = vpop.f32.mrf.mxu0
      %v1436 = vadd.f32 %v673, %v1435
      %v1437 = vpop.f32.mrf.mxu0
      %1438 = vmatprep.mubr.f32.mxu0 0.0
      %1439 = vmatmul.mubr.f32.gmra.mxu0 %v1259
      %v1440 = vpop.f32.mrf.mxu0
      %v1441 = vadd.f32 %v679, %v1440
      %v1442 = vpop.f32.mrf.mxu0
      %1443 = vmatprep.mubr.f32.mxu0 0.0
      %1444 = vmatmul.mubr.f32.gmra.mxu0 %v1260
      %v1445 = vpop.f32.mrf.mxu0
      %v1446 = vadd.f32 %v685, %v1445
      %v1447 = vpop.f32.mrf.mxu0
      %1448 = vmatprep.mubr.f32.mxu0 0.0
      %1449 = vmatmul.mubr.f32.gmra.mxu0 %v1261
      %v1450 = vpop.f32.mrf.mxu0
      %v1451 = vadd.f32 %v691, %v1450
      %v1452 = vpop.f32.mrf.mxu0
      %1453 = vmatprep.mubr.f32.mxu0 0.0
      %1454 = vmatmul.mubr.f32.gmra.mxu0 %v1262
      %v1455 = vpop.f32.mrf.mxu0
      %v1456 = vadd.f32 %v697, %v1455
      %v1457 = vpop.f32.mrf.mxu0
      %1458 = vmatprep.mubr.f32.mxu0 0.0
      %1459 = vmatmul.mubr.f32.gmra.mxu0 %v1263
      %v1460 = vpop.f32.mrf.mxu0
      %v1461 = vadd.f32 %v703, %v1460
      %v1462 = vpop.f32.mrf.mxu0
      %1463 = vmatprep.mubr.f32.mxu0 0.0
      %1464 = vmatmul.mubr.f32.gmra.mxu0 %v1264
      %v1465 = vpop.f32.mrf.mxu0
      %v1466 = vadd.f32 %v709, %v1465
      %v1467 = vpop.f32.mrf.mxu0
      %1468 = vmatprep.mubr.f32.mxu0 0.0
      %1469 = vmatmul.mubr.f32.gmra.mxu0 %v1265
      %v1470 = vpop.f32.mrf.mxu0
      %v1471 = vadd.f32 %v715, %v1470
      %v1472 = vpop.f32.mrf.mxu0
      %1473 = vmatprep.mubr.f32.mxu0 0.0
      %1474 = vmatmul.mubr.f32.gmra.mxu0 %v1266
      %v1475 = vpop.f32.mrf.mxu0
      %v1476 = vadd.f32 %v721, %v1475
      %v1477 = vpop.f32.mrf.mxu0
      %1478 = vmatprep.mubr.f32.mxu0 0.0
      %1479 = vmatmul.mubr.f32.gmra.mxu0 %v1267
      %v1480 = vpop.f32.mrf.mxu0
      %v1481 = vadd.f32 %v727, %v1480
      %v1482 = vpop.f32.mrf.mxu0
      %1483 = vmatprep.mubr.f32.mxu0 0.0
      %1484 = vmatmul.mubr.f32.gmra.mxu0 %v1268
      %v1485 = vpop.f32.mrf.mxu0
      %v1486 = vadd.f32 %v733, %v1485
      %v1487 = vpop.f32.mrf.mxu0
      %1488 = vmatprep.mubr.f32.mxu0 0.0
      %1489 = vmatmul.mubr.f32.gmra.mxu0 %v1269
      %v1490 = vpop.f32.mrf.mxu0
      %v1491 = vadd.f32 %v739, %v1490
      %v1492 = vpop.f32.mrf.mxu0
      %1493 = vmatprep.mubr.f32.mxu0 0.0
      %1494 = vmatmul.mubr.f32.gmra.mxu0 %v1270
      %v1495 = vpop.f32.mrf.mxu0
      %v1496 = vadd.f32 %v745, %v1495
      %v1497 = vpop.f32.mrf.mxu0
      %1498 = vmatprep.mubr.f32.mxu0 0.0
      %1499 = vmatmul.mubr.f32.gmra.mxu0 %v1271
      %v1500 = vpop.f32.mrf.mxu0
      %v1501 = vadd.f32 %v751, %v1500
      %v1502 = vpop.f32.mrf.mxu0
      %1503 = vmatprep.mubr.f32.mxu0 0.0
      %1504 = vmatmul.mubr.f32.gmra.mxu0 %v1272
      %v1505 = vpop.f32.mrf.mxu0
      %v1506 = vadd.f32 %v757, %v1505
      %v1507 = vpop.f32.mrf.mxu0
      %1508 = vmatprep.mubr.f32.mxu0 0.0
      %1509 = vmatmul.mubr.f32.gmra.mxu0 %v1273
      %v1510 = vpop.f32.mrf.mxu0
      %v1511 = vadd.f32 %v763, %v1510
      %v1512 = vpop.f32.mrf.mxu0
      %1513 = vmatprep.mubr.f32.mxu0 0.0
      %1514 = vmatmul.mubr.f32.gmra.mxu0 %v1274
      %v1515 = vpop.f32.mrf.mxu0
      %v1516 = vadd.f32 %v769, %v1515
      %v1517 = vpop.f32.mrf.mxu0
      %1518 = vmatprep.mubr.f32.mxu0 0.0
      %1519 = vmatmul.mubr.f32.gmra.mxu0 %v1275
      %v1520 = vpop.f32.mrf.mxu0
      %v1521 = vadd.f32 %v775, %v1520
      %v1522 = vpop.f32.mrf.mxu0
      %1523 = vmatprep.mubr.f32.mxu0 0.0
      %1524 = vmatmul.mubr.f32.gmra.mxu0 %v1276
      %v1525 = vpop.f32.mrf.mxu0
      %v1526 = vadd.f32 %v781, %v1525
      %v1527 = vpop.f32.mrf.mxu0
      %1528 = vmatprep.mubr.f32.mxu0 0.0
      %1529 = vmatmul.mubr.f32.gmra.mxu0 %v1277
      %v1530 = vpop.f32.mrf.mxu0
      %v1531 = vadd.f32 %v787, %v1530
      %v1532 = vpop.f32.mrf.mxu0
      %1533 = vmatprep.mubr.f32.mxu0 0.0
      %1534 = vmatmul.mubr.f32.gmra.mxu0 %v1278
      %v1535 = vpop.f32.mrf.mxu0
      %v1536 = vadd.f32 %v793, %v1535
      %v1537 = vpop.f32.mrf.mxu0
      %1538 = vmatprep.mubr.f32.mxu0 0.0
      %1539 = vmatmul.mubr.f32.gmra.mxu0 %v1279
      %v1540 = vpop.f32.mrf.mxu0
      %v1541 = vadd.f32 %v799, %v1540
      %v1542 = vpop.f32.mrf.mxu0
      %1543 = vmatprep.mubr.f32.mxu0 0.0
      %1544 = vmatmul.mubr.f32.gmra.mxu0 %v1280
      %v1545 = vpop.f32.mrf.mxu0
      %v1546 = vadd.f32 %v805, %v1545
      %v1547 = vpop.f32.mrf.mxu0
      %1548 = vmatprep.mubr.f32.mxu0 0.0
      %1549 = vmatmul.mubr.f32.gmra.mxu0 %v1281
      %v1550 = vpop.f32.mrf.mxu0
      %v1551 = vadd.f32 %v811, %v1550
      %v1552 = vpop.f32.mrf.mxu0
      %1553 = vmatprep.mubr.f32.mxu0 0.0
      %1554 = vmatmul.mubr.f32.gmra.mxu0 %v1282
      %v1555 = vpop.f32.mrf.mxu0
      %v1556 = vadd.f32 %v817, %v1555
      %v1557 = vpop.f32.mrf.mxu0
      %1558 = vmatprep.mubr.f32.mxu0 0.0
      %1559 = vmatmul.mubr.f32.gmra.mxu0 %v1283
      %v1560 = vpop.f32.mrf.mxu0
      %v1561 = vadd.f32 %v823, %v1560
      %v1562 = vpop.f32.mrf.mxu0
      %1563 = vmatprep.mubr.f32.mxu0 0.0
      %1564 = vmatmul.mubr.f32.gmra.mxu0 %v1284
      %v1565 = vpop.f32.mrf.mxu0
      %v1566 = vadd.f32 %v829, %v1565
      %v1567 = vpop.f32.mrf.mxu0
      %1568 = vmatprep.mubr.f32.mxu0 0.0
      %1569 = vmatmul.mubr.f32.gmra.mxu0 %v1285
      %v1570 = vpop.f32.mrf.mxu0
      %v1571 = vadd.f32 %v835, %v1570
      %v1572 = vpop.f32.mrf.mxu0
      %1573 = vmatprep.mubr.f32.mxu0 0.0
      %1574 = vmatmul.mubr.f32.gmra.mxu0 %v1286
      %v1575 = vpop.f32.mrf.mxu0
      %v1576 = vadd.f32 %v841, %v1575
      %v1577 = vpop.f32.mrf.mxu0
      %1578 = vmatprep.mubr.f32.mxu0 0.0
      %1579 = vmatmul.mubr.f32.gmra.mxu0 %v1287
      %v1580 = vpop.f32.mrf.mxu0
      %v1581 = vadd.f32 %v847, %v1580
      %v1582 = vpop.f32.mrf.mxu0
      %1583 = vdwg.mxu0
      %v1584 = vld [vmem:[%s6] sm:$0x1]
      %v1586 = vlaneseq
      %v1587 = vshrl.u32 %v1586, 7
      %v1588 = vsub.s32 0, %v1587
      %v1589 = vrot.slane %v1584, %v1588
      %v1591 = vadd.f32 %v1371, %v1589
      %v1592 = vadd.f32 %v1376, %v1589
      %v1593 = vadd.f32 %v1381, %v1589
      %v1594 = vadd.f32 %v1386, %v1589
      %v1595 = vadd.f32 %v1391, %v1589
      %v1596 = vadd.f32 %v1396, %v1589
      %v1597 = vadd.f32 %v1401, %v1589
      %v1598 = vadd.f32 %v1406, %v1589
      %v1599 = vadd.f32 %v1411, %v1589
      %v1600 = vadd.f32 %v1416, %v1589
      %v1601 = vadd.f32 %v1421, %v1589
      %v1602 = vadd.f32 %v1426, %v1589
      %v1603 = vadd.f32 %v1431, %v1589
      %v1604 = vadd.f32 %v1436, %v1589
      %v1605 = vadd.f32 %v1441, %v1589
      %v1606 = vadd.f32 %v1446, %v1589
      %v1607 = vadd.f32 %v1451, %v1589
      %v1608 = vadd.f32 %v1456, %v1589
      %v1609 = vadd.f32 %v1461, %v1589
      %v1610 = vadd.f32 %v1466, %v1589
      %v1611 = vadd.f32 %v1471, %v1589
      %v1612 = vadd.f32 %v1476, %v1589
      %v1613 = vadd.f32 %v1481, %v1589
      %v1614 = vadd.f32 %v1486, %v1589
      %v1615 = vadd.f32 %v1491, %v1589
      %v1616 = vadd.f32 %v1496, %v1589
      %v1617 = vadd.f32 %v1501, %v1589
      %v1618 = vadd.f32 %v1506, %v1589
      %v1619 = vadd.f32 %v1511, %v1589
      %v1620 = vadd.f32 %v1516, %v1589
      %v1621 = vadd.f32 %v1521, %v1589
      %v1622 = vadd.f32 %v1526, %v1589
      %v1623 = vadd.f32 %v1531, %v1589
      %v1624 = vadd.f32 %v1536, %v1589
      %v1625 = vadd.f32 %v1541, %v1589
      %v1626 = vadd.f32 %v1546, %v1589
      %v1627 = vadd.f32 %v1551, %v1589
      %v1628 = vadd.f32 %v1556, %v1589
      %v1629 = vadd.f32 %v1561, %v1589
      %v1630 = vadd.f32 %v1566, %v1589
      %v1631 = vadd.f32 %v1571, %v1589
      %v1632 = vadd.f32 %v1576, %v1589
      %v1633 = vadd.f32 %v1581, %v1589
      %v1634 = vmax.f32 %v1591, 0.0
      %v1635 = vmax.f32 %v1592, 0.0
      %v1636 = vmax.f32 %v1593, 0.0
      %v1637 = vmax.f32 %v1594, 0.0
      %v1638 = vmax.f32 %v1595, 0.0
      %v1639 = vmax.f32 %v1596, 0.0
      %v1640 = vmax.f32 %v1597, 0.0
      %v1641 = vmax.f32 %v1598, 0.0
      %v1642 = vmax.f32 %v1599, 0.0
      %v1643 = vmax.f32 %v1600, 0.0
      %v1644 = vmax.f32 %v1601, 0.0
      %v1645 = vmax.f32 %v1602, 0.0
      %v1646 = vmax.f32 %v1603, 0.0
      %v1647 = vmax.f32 %v1604, 0.0
      %v1648 = vmax.f32 %v1605, 0.0
      %v1649 = vmax.f32 %v1606, 0.0
      %v1650 = vmax.f32 %v1607, 0.0
      %v1651 = vmax.f32 %v1608, 0.0
      %v1652 = vmax.f32 %v1609, 0.0
      %v1653 = vmax.f32 %v1610, 0.0
      %v1654 = vmax.f32 %v1611, 0.0
      %v1655 = vmax.f32 %v1612, 0.0
      %v1656 = vmax.f32 %v1613, 0.0
      %v1657 = vmax.f32 %v1614, 0.0
      %v1658 = vmax.f32 %v1615, 0.0
      %v1659 = vmax.f32 %v1616, 0.0
      %v1660 = vmax.f32 %v1617, 0.0
      %v1661 = vmax.f32 %v1618, 0.0
      %v1662 = vmax.f32 %v1619, 0.0
      %v1663 = vmax.f32 %v1620, 0.0
      %v1664 = vmax.f32 %v1621, 0.0
      %v1665 = vmax.f32 %v1622, 0.0
      %v1666 = vmax.f32 %v1623, 0.0
      %v1667 = vmax.f32 %v1624, 0.0
      %v1668 = vmax.f32 %v1625, 0.0
      %v1669 = vmax.f32 %v1626, 0.0
      %v1670 = vmax.f32 %v1627, 0.0
      %v1671 = vmax.f32 %v1628, 0.0
      %v1672 = vmax.f32 %v1629, 0.0
      %v1673 = vmax.f32 %v1630, 0.0
      %v1674 = vmax.f32 %v1631, 0.0
      %v1675 = vmax.f32 %v1632, 0.0
      %v1676 = vmax.f32 %v1633, 0.0
      %v1677 = vld [vmem:[%s7] sm:$0xff]
      %v1678 = vld [vmem:[%s7 + $0x8] sm:$0xff]
      %v1679 = vld [vmem:[%s7 + $0x10] sm:$0xff]
      %v1680 = vld [vmem:[%s7 + $0x18] sm:$0xff]
      %v1681 = vld [vmem:[%s7 + $0x20] sm:$0xff]
      %v1682 = vld [vmem:[%s7 + $0x28] sm:$0xff]
      %v1683 = vld [vmem:[%s7 + $0x30] sm:$0xff]
      %v1684 = vld [vmem:[%s7 + $0x38] sm:$0xff]
      %v1685 = vld [vmem:[%s7 + $0x40] sm:$0xff]
      %v1686 = vld [vmem:[%s7 + $0x48] sm:$0xff]
      %v1687 = vld [vmem:[%s7 + $0x50] sm:$0xff]
      %v1688 = vld [vmem:[%s7 + $0x58] sm:$0xff]
      %v1689 = vld [vmem:[%s7 + $0x60] sm:$0xff]
      %v1690 = vld [vmem:[%s7 + $0x68] sm:$0xff]
      %v1691 = vld [vmem:[%s7 + $0x70] sm:$0xff]
      %v1692 = vld [vmem:[%s7 + $0x78] sm:$0xff]
      %v1693 = vld [vmem:[%s8] sm:$0x1]
      %v1695 = vlaneseq
      %v1696 = vshrl.u32 %v1695, 7
      %v1697 = vsub.s32 0, %v1696
      %v1698 = vrot.slane %v1693, %v1697
      %1700 = vmatprep.subr.mxu0 0.0
      %1701 = vmatpush1.msra.mxu0 %v1692
      %1702 = vmatprep.subr.mxu0 0.0
      %1703 = vmatpush1.msra.mxu0 %v1691
      %1704 = vmatprep.subr.mxu0 0.0
      %1705 = vmatpush1.msra.mxu0 %v1690
      %1706 = vmatprep.subr.mxu0 0.0
      %1707 = vmatpush1.msra.mxu0 %v1689
      %1708 = vmatprep.subr.mxu0 0.0
      %1709 = vmatpush1.msra.mxu0 %v1688
      %1710 = vmatprep.subr.mxu0 0.0
      %1711 = vmatpush1.msra.mxu0 %v1687
      %1712 = vmatprep.subr.mxu0 0.0
      %1713 = vmatpush1.msra.mxu0 %v1686
      %1714 = vmatprep.subr.mxu0 0.0
      %1715 = vmatpush1.msra.mxu0 %v1685
      %1716 = vmatprep.subr.mxu0 0.0
      %1717 = vmatpush1.msra.mxu0 %v1684
      %1718 = vmatprep.subr.mxu0 0.0
      %1719 = vmatpush1.msra.mxu0 %v1683
      %1720 = vmatprep.subr.mxu0 0.0
      %1721 = vmatpush1.msra.mxu0 %v1682
      %1722 = vmatprep.subr.mxu0 0.0
      %1723 = vmatpush1.msra.mxu0 %v1681
      %1724 = vmatprep.subr.mxu0 0.0
      %1725 = vmatpush1.msra.mxu0 %v1680
      %1726 = vmatprep.subr.mxu0 0.0
      %1727 = vmatpush1.msra.mxu0 %v1679
      %1728 = vmatprep.subr.mxu0 0.0
      %1729 = vmatpush1.msra.mxu0 %v1678
      %1730 = vmatprep.subr.mxu0 0.0
      %1731 = vmatpush1.msra.mxu0 %v1677
      %1732 = vmatprep.subr.mxu0 0.0
      %1733 = vmatpush2.msra.mxu0 0.0
      %1734 = vmatprep.subr.mxu0 0.0
      %1735 = vmatpush2.msra.mxu0 0.0
      %1736 = vmatprep.subr.mxu0 0.0
      %1737 = vmatpush2.msra.mxu0 0.0
      %1738 = vmatprep.subr.mxu0 0.0
      %1739 = vmatpush2.msra.mxu0 0.0
      %1740 = vmatprep.subr.mxu0 0.0
      %1741 = vmatpush2.msra.mxu0 0.0
      %1742 = vmatprep.subr.mxu0 0.0
      %1743 = vmatpush2.msra.mxu0 0.0
      %1744 = vmatprep.subr.mxu0 0.0
      %1745 = vmatpush2.msra.mxu0 0.0
      %1746 = vmatprep.subr.mxu0 0.0
      %1747 = vmatpush2.msra.mxu0 0.0
      %1748 = vmatprep.subr.mxu0 0.0
      %1749 = vmatpush2.msra.mxu0 0.0
      %1750 = vmatprep.subr.mxu0 0.0
      %1751 = vmatpush2.msra.mxu0 0.0
      %1752 = vmatprep.subr.mxu0 0.0
      %1753 = vmatpush2.msra.mxu0 0.0
      %1754 = vmatprep.subr.mxu0 0.0
      %1755 = vmatpush2.msra.mxu0 0.0
      %1756 = vmatprep.subr.mxu0 0.0
      %1757 = vmatpush2.msra.mxu0 0.0
      %1758 = vmatprep.subr.mxu0 0.0
      %1759 = vmatpush2.msra.mxu0 0.0
      %1760 = vmatprep.subr.mxu0 0.0
      %1761 = vmatpush2.msra.mxu0 0.0
      %1762 = vmatprep.subr.mxu0 0.0
      %1763 = vmatpush2.msra.mxu0 0.0
      %1764 = vmatprep.mubr.f32.mxu0 0.0
      %1765 = vmatmul.mubr.f32.gmra.mxu0 %v1634
      %v1766 = vpop.f32.mrf.mxu0
      %v1767 = vadd.f32 %v1698, %v1766
      %v1768 = vpop.f32.mrf.mxu0
      %1769 = vmatprep.mubr.f32.mxu0 0.0
      %1770 = vmatmul.mubr.f32.gmra.mxu0 %v1635
      %v1771 = vpop.f32.mrf.mxu0
      %v1772 = vadd.f32 %v1698, %v1771
      %v1773 = vpop.f32.mrf.mxu0
      %1774 = vmatprep.mubr.f32.mxu0 0.0
      %1775 = vmatmul.mubr.f32.gmra.mxu0 %v1636
      %v1776 = vpop.f32.mrf.mxu0
      %v1777 = vadd.f32 %v1698, %v1776
      %v1778 = vpop.f32.mrf.mxu0
      %1779 = vmatprep.mubr.f32.mxu0 0.0
      %1780 = vmatmul.mubr.f32.gmra.mxu0 %v1637
      %v1781 = vpop.f32.mrf.mxu0
      %v1782 = vadd.f32 %v1698, %v1781
      %v1783 = vpop.f32.mrf.mxu0
      %1784 = vmatprep.mubr.f32.mxu0 0.0
      %1785 = vmatmul.mubr.f32.gmra.mxu0 %v1638
      %v1786 = vpop.f32.mrf.mxu0
      %v1787 = vadd.f32 %v1698, %v1786
      %v1788 = vpop.f32.mrf.mxu0
      %1789 = vmatprep.mubr.f32.mxu0 0.0
      %1790 = vmatmul.mubr.f32.gmra.mxu0 %v1639
      %v1791 = vpop.f32.mrf.mxu0
      %v1792 = vadd.f32 %v1698, %v1791
      %v1793 = vpop.f32.mrf.mxu0
      %1794 = vmatprep.mubr.f32.mxu0 0.0
      %1795 = vmatmul.mubr.f32.gmra.mxu0 %v1640
      %v1796 = vpop.f32.mrf.mxu0
      %v1797 = vadd.f32 %v1698, %v1796
      %v1798 = vpop.f32.mrf.mxu0
      %1799 = vmatprep.mubr.f32.mxu0 0.0
      %1800 = vmatmul.mubr.f32.gmra.mxu0 %v1641
      %v1801 = vpop.f32.mrf.mxu0
      %v1802 = vadd.f32 %v1698, %v1801
      %v1803 = vpop.f32.mrf.mxu0
      %1804 = vmatprep.mubr.f32.mxu0 0.0
      %1805 = vmatmul.mubr.f32.gmra.mxu0 %v1642
      %v1806 = vpop.f32.mrf.mxu0
      %v1807 = vadd.f32 %v1698, %v1806
      %v1808 = vpop.f32.mrf.mxu0
      %1809 = vmatprep.mubr.f32.mxu0 0.0
      %1810 = vmatmul.mubr.f32.gmra.mxu0 %v1643
      %v1811 = vpop.f32.mrf.mxu0
      %v1812 = vadd.f32 %v1698, %v1811
      %v1813 = vpop.f32.mrf.mxu0
      %1814 = vmatprep.mubr.f32.mxu0 0.0
      %1815 = vmatmul.mubr.f32.gmra.mxu0 %v1644
      %v1816 = vpop.f32.mrf.mxu0
      %v1817 = vadd.f32 %v1698, %v1816
      %v1818 = vpop.f32.mrf.mxu0
      %1819 = vmatprep.mubr.f32.mxu0 0.0
      %1820 = vmatmul.mubr.f32.gmra.mxu0 %v1645
      %v1821 = vpop.f32.mrf.mxu0
      %v1822 = vadd.f32 %v1698, %v1821
      %v1823 = vpop.f32.mrf.mxu0
      %1824 = vmatprep.mubr.f32.mxu0 0.0
      %1825 = vmatmul.mubr.f32.gmra.mxu0 %v1646
      %v1826 = vpop.f32.mrf.mxu0
      %v1827 = vadd.f32 %v1698, %v1826
      %v1828 = vpop.f32.mrf.mxu0
      %1829 = vmatprep.mubr.f32.mxu0 0.0
      %1830 = vmatmul.mubr.f32.gmra.mxu0 %v1647
      %v1831 = vpop.f32.mrf.mxu0
      %v1832 = vadd.f32 %v1698, %v1831
      %v1833 = vpop.f32.mrf.mxu0
      %1834 = vmatprep.mubr.f32.mxu0 0.0
      %1835 = vmatmul.mubr.f32.gmra.mxu0 %v1648
      %v1836 = vpop.f32.mrf.mxu0
      %v1837 = vadd.f32 %v1698, %v1836
      %v1838 = vpop.f32.mrf.mxu0
      %1839 = vmatprep.mubr.f32.mxu0 0.0
      %1840 = vmatmul.mubr.f32.gmra.mxu0 %v1649
      %v1841 = vpop.f32.mrf.mxu0
      %v1842 = vadd.f32 %v1698, %v1841
      %v1843 = vpop.f32.mrf.mxu0
      %1844 = vmatprep.mubr.f32.mxu0 0.0
      %1845 = vmatmul.mubr.f32.gmra.mxu0 %v1650
      %v1846 = vpop.f32.mrf.mxu0
      %v1847 = vadd.f32 %v1698, %v1846
      %v1848 = vpop.f32.mrf.mxu0
      %1849 = vmatprep.mubr.f32.mxu0 0.0
      %1850 = vmatmul.mubr.f32.gmra.mxu0 %v1651
      %v1851 = vpop.f32.mrf.mxu0
      %v1852 = vadd.f32 %v1698, %v1851
      %v1853 = vpop.f32.mrf.mxu0
      %1854 = vmatprep.mubr.f32.mxu0 0.0
      %1855 = vmatmul.mubr.f32.gmra.mxu0 %v1652
      %v1856 = vpop.f32.mrf.mxu0
      %v1857 = vadd.f32 %v1698, %v1856
      %v1858 = vpop.f32.mrf.mxu0
      %1859 = vmatprep.mubr.f32.mxu0 0.0
      %1860 = vmatmul.mubr.f32.gmra.mxu0 %v1653
      %v1861 = vpop.f32.mrf.mxu0
      %v1862 = vadd.f32 %v1698, %v1861
      %v1863 = vpop.f32.mrf.mxu0
      %1864 = vmatprep.mubr.f32.mxu0 0.0
      %1865 = vmatmul.mubr.f32.gmra.mxu0 %v1654
      %v1866 = vpop.f32.mrf.mxu0
      %v1867 = vadd.f32 %v1698, %v1866
      %v1868 = vpop.f32.mrf.mxu0
      %1869 = vmatprep.mubr.f32.mxu0 0.0
      %1870 = vmatmul.mubr.f32.gmra.mxu0 %v1655
      %v1871 = vpop.f32.mrf.mxu0
      %v1872 = vadd.f32 %v1698, %v1871
      %v1873 = vpop.f32.mrf.mxu0
      %1874 = vmatprep.mubr.f32.mxu0 0.0
      %1875 = vmatmul.mubr.f32.gmra.mxu0 %v1656
      %v1876 = vpop.f32.mrf.mxu0
      %v1877 = vadd.f32 %v1698, %v1876
      %v1878 = vpop.f32.mrf.mxu0
      %1879 = vmatprep.mubr.f32.mxu0 0.0
      %1880 = vmatmul.mubr.f32.gmra.mxu0 %v1657
      %v1881 = vpop.f32.mrf.mxu0
      %v1882 = vadd.f32 %v1698, %v1881
      %v1883 = vpop.f32.mrf.mxu0
      %1884 = vmatprep.mubr.f32.mxu0 0.0
      %1885 = vmatmul.mubr.f32.gmra.mxu0 %v1658
      %v1886 = vpop.f32.mrf.mxu0
      %v1887 = vadd.f32 %v1698, %v1886
      %v1888 = vpop.f32.mrf.mxu0
      %1889 = vmatprep.mubr.f32.mxu0 0.0
      %1890 = vmatmul.mubr.f32.gmra.mxu0 %v1659
      %v1891 = vpop.f32.mrf.mxu0
      %v1892 = vadd.f32 %v1698, %v1891
      %v1893 = vpop.f32.mrf.mxu0
      %1894 = vmatprep.mubr.f32.mxu0 0.0
      %1895 = vmatmul.mubr.f32.gmra.mxu0 %v1660
      %v1896 = vpop.f32.mrf.mxu0
      %v1897 = vadd.f32 %v1698, %v1896
      %v1898 = vpop.f32.mrf.mxu0
      %1899 = vmatprep.mubr.f32.mxu0 0.0
      %1900 = vmatmul.mubr.f32.gmra.mxu0 %v1661
      %v1901 = vpop.f32.mrf.mxu0
      %v1902 = vadd.f32 %v1698, %v1901
      %v1903 = vpop.f32.mrf.mxu0
      %1904 = vmatprep.mubr.f32.mxu0 0.0
      %1905 = vmatmul.mubr.f32.gmra.mxu0 %v1662
      %v1906 = vpop.f32.mrf.mxu0
      %v1907 = vadd.f32 %v1698, %v1906
      %v1908 = vpop.f32.mrf.mxu0
      %1909 = vmatprep.mubr.f32.mxu0 0.0
      %1910 = vmatmul.mubr.f32.gmra.mxu0 %v1663
      %v1911 = vpop.f32.mrf.mxu0
      %v1912 = vadd.f32 %v1698, %v1911
      %v1913 = vpop.f32.mrf.mxu0
      %1914 = vmatprep.mubr.f32.mxu0 0.0
      %1915 = vmatmul.mubr.f32.gmra.mxu0 %v1664
      %v1916 = vpop.f32.mrf.mxu0
      %v1917 = vadd.f32 %v1698, %v1916
      %v1918 = vpop.f32.mrf.mxu0
      %1919 = vmatprep.mubr.f32.mxu0 0.0
      %1920 = vmatmul.mubr.f32.gmra.mxu0 %v1665
      %v1921 = vpop.f32.mrf.mxu0
      %v1922 = vadd.f32 %v1698, %v1921
      %v1923 = vpop.f32.mrf.mxu0
      %1924 = vmatprep.mubr.f32.mxu0 0.0
      %1925 = vmatmul.mubr.f32.gmra.mxu0 %v1666
      %v1926 = vpop.f32.mrf.mxu0
      %v1927 = vadd.f32 %v1698, %v1926
      %v1928 = vpop.f32.mrf.mxu0
      %1929 = vmatprep.mubr.f32.mxu0 0.0
      %1930 = vmatmul.mubr.f32.gmra.mxu0 %v1667
      %v1931 = vpop.f32.mrf.mxu0
      %v1932 = vadd.f32 %v1698, %v1931
      %v1933 = vpop.f32.mrf.mxu0
      %1934 = vmatprep.mubr.f32.mxu0 0.0
      %1935 = vmatmul.mubr.f32.gmra.mxu0 %v1668
      %v1936 = vpop.f32.mrf.mxu0
      %v1937 = vadd.f32 %v1698, %v1936
      %v1938 = vpop.f32.mrf.mxu0
      %1939 = vmatprep.mubr.f32.mxu0 0.0
      %1940 = vmatmul.mubr.f32.gmra.mxu0 %v1669
      %v1941 = vpop.f32.mrf.mxu0
      %v1942 = vadd.f32 %v1698, %v1941
      %v1943 = vpop.f32.mrf.mxu0
      %1944 = vmatprep.mubr.f32.mxu0 0.0
      %1945 = vmatmul.mubr.f32.gmra.mxu0 %v1670
      %v1946 = vpop.f32.mrf.mxu0
      %v1947 = vadd.f32 %v1698, %v1946
      %v1948 = vpop.f32.mrf.mxu0
      %1949 = vmatprep.mubr.f32.mxu0 0.0
      %1950 = vmatmul.mubr.f32.gmra.mxu0 %v1671
      %v1951 = vpop.f32.mrf.mxu0
      %v1952 = vadd.f32 %v1698, %v1951
      %v1953 = vpop.f32.mrf.mxu0
      %1954 = vmatprep.mubr.f32.mxu0 0.0
      %1955 = vmatmul.mubr.f32.gmra.mxu0 %v1672
      %v1956 = vpop.f32.mrf.mxu0
      %v1957 = vadd.f32 %v1698, %v1956
      %v1958 = vpop.f32.mrf.mxu0
      %1959 = vmatprep.mubr.f32.mxu0 0.0
      %1960 = vmatmul.mubr.f32.gmra.mxu0 %v1673
      %v1961 = vpop.f32.mrf.mxu0
      %v1962 = vadd.f32 %v1698, %v1961
      %v1963 = vpop.f32.mrf.mxu0
      %1964 = vmatprep.mubr.f32.mxu0 0.0
      %1965 = vmatmul.mubr.f32.gmra.mxu0 %v1674
      %v1966 = vpop.f32.mrf.mxu0
      %v1967 = vadd.f32 %v1698, %v1966
      %v1968 = vpop.f32.mrf.mxu0
      %1969 = vmatprep.mubr.f32.mxu0 0.0
      %1970 = vmatmul.mubr.f32.gmra.mxu0 %v1675
      %v1971 = vpop.f32.mrf.mxu0
      %v1972 = vadd.f32 %v1698, %v1971
      %v1973 = vpop.f32.mrf.mxu0
      %1974 = vmatprep.mubr.f32.mxu0 0.0
      %1975 = vmatmul.mubr.f32.gmra.mxu0 %v1676
      %v1976 = vpop.f32.mrf.mxu0
      %v1977 = vadd.f32 %v1698, %v1976
      %v1978 = vpop.f32.mrf.mxu0
      %1979 = vdwg.mxu0
      %vm1980 = vcmask 31744
      %1981 = vst.msk [vmem:[%s334] sm:$0xff] %vm1980, %v1767
      %1982 = vst.msk [vmem:[%s334 + $0x8] sm:$0xff] %vm1980, %v1772
      %1983 = vst.msk [vmem:[%s334 + $0x10] sm:$0xff] %vm1980, %v1777
      %1984 = vst.msk [vmem:[%s334 + $0x18] sm:$0xff] %vm1980, %v1782
      %1985 = vst.msk [vmem:[%s334 + $0x20] sm:$0xff] %vm1980, %v1787
      %1986 = vst.msk [vmem:[%s334 + $0x28] sm:$0xff] %vm1980, %v1792
      %1987 = vst.msk [vmem:[%s334 + $0x30] sm:$0xff] %vm1980, %v1797
      %1988 = vst.msk [vmem:[%s334 + $0x38] sm:$0xff] %vm1980, %v1802
      %1989 = vst.msk [vmem:[%s334 + $0x40] sm:$0xff] %vm1980, %v1807
      %1990 = vst.msk [vmem:[%s334 + $0x48] sm:$0xff] %vm1980, %v1812
      %1991 = vst.msk [vmem:[%s334 + $0x50] sm:$0xff] %vm1980, %v1817
      %1992 = vst.msk [vmem:[%s334 + $0x58] sm:$0xff] %vm1980, %v1822
      %1993 = vst.msk [vmem:[%s334 + $0x60] sm:$0xff] %vm1980, %v1827
      %1994 = vst.msk [vmem:[%s334 + $0x68] sm:$0xff] %vm1980, %v1832
      %1995 = vst.msk [vmem:[%s334 + $0x70] sm:$0xff] %vm1980, %v1837
      %1996 = vst.msk [vmem:[%s334 + $0x78] sm:$0xff] %vm1980, %v1842
      %1997 = vst.msk [vmem:[%s334 + $0x80] sm:$0xff] %vm1980, %v1847
      %1998 = vst.msk [vmem:[%s334 + $0x88] sm:$0xff] %vm1980, %v1852
      %1999 = vst.msk [vmem:[%s334 + $0x90] sm:$0xff] %vm1980, %v1857
      %2000 = vst.msk [vmem:[%s334 + $0x98] sm:$0xff] %vm1980, %v1862
      %2001 = vst.msk [vmem:[%s334 + $0xa0] sm:$0xff] %vm1980, %v1867
      %2002 = vst.msk [vmem:[%s334 + $0xa8] sm:$0xff] %vm1980, %v1872
      %2003 = vst.msk [vmem:[%s334 + $0xb0] sm:$0xff] %vm1980, %v1877
      %2004 = vst.msk [vmem:[%s334 + $0xb8] sm:$0xff] %vm1980, %v1882
      %2005 = vst.msk [vmem:[%s334 + $0xc0] sm:$0xff] %vm1980, %v1887
      %2006 = vst.msk [vmem:[%s334 + $0xc8] sm:$0xff] %vm1980, %v1892
      %2007 = vst.msk [vmem:[%s334 + $0xd0] sm:$0xff] %vm1980, %v1897
      %2008 = vst.msk [vmem:[%s334 + $0xd8] sm:$0xff] %vm1980, %v1902
      %2009 = vst.msk [vmem:[%s334 + $0xe0] sm:$0xff] %vm1980, %v1907
      %2010 = vst.msk [vmem:[%s334 + $0xe8] sm:$0xff] %vm1980, %v1912
      %2011 = vst.msk [vmem:[%s334 + $0xf0] sm:$0xff] %vm1980, %v1917
      %2012 = vst.msk [vmem:[%s334 + $0xf8] sm:$0xff] %vm1980, %v1922
      %2013 = vst.msk [vmem:[%s334 + $0x100] sm:$0xff] %vm1980, %v1927
      %2014 = vst.msk [vmem:[%s334 + $0x108] sm:$0xff] %vm1980, %v1932
      %2015 = vst.msk [vmem:[%s334 + $0x110] sm:$0xff] %vm1980, %v1937
      %2016 = vst.msk [vmem:[%s334 + $0x118] sm:$0xff] %vm1980, %v1942
      %2017 = vst.msk [vmem:[%s334 + $0x120] sm:$0xff] %vm1980, %v1947
      %2018 = vst.msk [vmem:[%s334 + $0x128] sm:$0xff] %vm1980, %v1952
      %2019 = vst.msk [vmem:[%s334 + $0x130] sm:$0xff] %vm1980, %v1957
      %2020 = vst.msk [vmem:[%s334 + $0x138] sm:$0xff] %vm1980, %v1962
      %2021 = vst.msk [vmem:[%s334 + $0x140] sm:$0xff] %vm1980, %v1967
      %2022 = vst.msk [vmem:[%s334 + $0x148] sm:$0xff] %vm1980, %v1972
      %2023 = vst.msk [vmem:[%s334 + $0x150] sm:$0xff] %vm1980, %v1977
      %s2024 = smul.u32 43, %s20
      %p2025 = scmp.lt.s32.totalorder %s2024, 128
      %s2026 = scalar_select %p2025, %s2024, 128
      %s2027 = smul.addr %s2026, 8
      %s2028 = scalar_lea.vmem %s9, %s2027
      // Predicated region
      $region57: #{tpu_custom_call.1} parent=55 // pred_check
        %p2029 = pneg %p232
      $region58: #{tpu_custom_call.1} parent=55 // pred_check_branch
        %2031 = sbr.rel (%p2029) target = $region60
      $region59: #{tpu_custom_call.1} parent=55 // pred_region
        %s2032 = smul.u32 43, %s20
      $region60: #{tpu_custom_call.1} parent=55 // pred_fallthru
        _
    $region56: #{tpu_custom_call.1} parent=5 // pred_fallthru
      _
    %p2033 = scmp.le.s32.totalorder 2, %s15
    // Predicated region
    $region61: #{tpu_custom_call.1} parent=5 // pred_check
      %p2034 = pneg %p2033
    $region62: #{tpu_custom_call.1} parent=5 // pred_check_branch
      %2036 = sbr.rel (%p2034) target = $region64
    $region63: #{tpu_custom_call.1} parent=5 // pred_region
      %s2037 = ssub.s32 %s15, 2
      // Predicated region
      $region65: #{tpu_custom_call.1} parent=63 // pred_check
        %p2038 = pneg %p238
      $region66: #{tpu_custom_call.1} parent=63 // pred_check_branch
        %2040 = sbr.rel (%p2038) target = $region68
      $region67: #{tpu_custom_call.1} parent=63 // pred_region
        %s2041 = smul.u32 43, %s21
        %p2042 = scmp.lt.s32.totalorder %s2041, 128
        %s2043 = scalar_select %p2042, %s2041, 128
        %s2044 = smul.addr %s2043, 8
        %s2045 = scalar_lea.vmem %s9, %s2044
      $region68: #{tpu_custom_call.1} parent=63 // pred_fallthru
        _
    $region64: #{tpu_custom_call.1} parent=5 // pred_fallthru
      _
  $region6: #{tpu_custom_call.1} parent=0 // loop_footer
    %s19 = sadd.s32 1, %s15
  $region7: #{tpu_custom_call.1} parent=0 // loop_footer_branch
    %14 = sbr.rel target = $region3
  $region8: #{tpu_custom_call.1} parent=0 // loop_exit
    _

</llo_original>
